<compile_context>
chip_gen: v7x
topology: tpu7x:2x2x1
jax: 0.10.0
libtpu: 0.0.40
codegen_flags: <defaults>
</compile_context>

<pallas_src>
import functools

import jax
import jax.numpy as jnp
from jax.experimental import pallas as pl
from jax.experimental.pallas import tpu as pltpu


def _ppm_fused_kernel(x_ref, halo_ref, w_ref, scale_ref, shift_ref, o_ref, *,
                      dila, dmax, tile_h, W, Cin, Ctot):
    """All PPM branches on one (tile_h x W) spatial tile.

    x_ref:     (1, tile_h, Wp, Cin)     main rows of the dmax-padded input (bf16)
    halo_ref:  (1, 2*dmax, Wp, Cin)     next 2*dmax rows (bottom halo)
    w_ref:     (B*9*Cin, B*Cout)        block-diagonal im2col conv weight (bf16)
    scale_ref: (1, B*Cout)              folded BN scale  = gamma / sqrt(var+eps)
    shift_ref: (1, B*Cout)              folded BN shift  = beta - mean*scale
    o_ref:     (1, tile_h, W, B*Cout)   channel-concatenated branch outputs
    """
    # Full halo'd tile: rows [t*tile_h, t*tile_h + tile_h + 2*dmax) of the
    # padded input.  Concat along the leading (non-lane) dim is cheap.
    xt = jnp.concatenate([x_ref[0], halo_ref[0]], axis=0)  # (tile_h+2dmax, Wp, Cin)

    # im2col: gather the 9 taps of every branch along the contraction axis.
    # Output (unpadded) row j / col c of the tile needs padded row
    # j + dmax + (kh-1)*d and padded col c + dmax + (kw-1)*d.
    taps = []
    for d in dila:
        for kh in range(3):
            for kw in range(3):
                r0 = dmax + (kh - 1) * d
                c0 = dmax + (kw - 1) * d
                taps.append(xt[r0:r0 + tile_h, c0:c0 + W, :])
    col = jnp.concatenate(taps, axis=-1)                     # (tile_h, W, B*9*Cin)
    col2d = col.reshape(tile_h * W, len(dila) * 9 * Cin)

    # One MXU matmul for all branches, f32 accumulation.
    acc = jnp.dot(col2d, w_ref[...], preferred_element_type=jnp.float32)

    # Fused eval-mode BatchNorm + ReLU epilogue in f32 (VPU work is free slack
    # next to the MXU / DMA here).
    y = jnp.maximum(acc * scale_ref[...] + shift_ref[...], 0.0)
    o_ref[...] = y.reshape(1, tile_h, W, Ctot).astype(o_ref.dtype)


def _build_ppm_call(N, h_pad, W, Cin, dila, Cout, tile_h, out_dtype):
    B = len(dila)
    dmax = max(dila)
    halo = 2 * dmax
    assert tile_h % halo == 0 and h_pad % tile_h == 0
    Wp = W + 2 * dmax
    Ctot = B * Cout
    K = B * 9 * Cin
    HT = h_pad // tile_h
    ratio = tile_h // halo                 # halo block-index stride

    kernel = functools.partial(_ppm_fused_kernel, dila=tuple(dila), dmax=dmax,
                               tile_h=tile_h, W=W, Cin=Cin, Ctot=Ctot)

    # Explicit VMEM budget: double-buffered in/out tiles + resident weight
    # + im2col / accumulator temporaries, with 2x headroom.
    est = (2 * (tile_h * Wp * Cin * 2 + halo * Wp * Cin * 2
                + tile_h * W * Ctot * 4)
           + K * Ctot * 2 + tile_h * W * K * 2 + tile_h * W * Ctot * 4
           + (1 << 20))
    vmem_limit = int(min(64 * 1024 * 1024, max(32 * 1024 * 1024, 2 * est)))

    return pl.pallas_call(
        kernel,
        out_shape=jax.ShapeDtypeStruct((N, h_pad, W, Ctot), out_dtype),
        grid=(N, HT),
        in_specs=[
            # Main rows of the padded input for this tile.
            pl.BlockSpec((1, tile_h, Wp, Cin), lambda n, t: (n, t, 0, 0)),
            # Bottom halo: the 2*dmax rows immediately after the main block.
            pl.BlockSpec((1, halo, Wp, Cin),
                         lambda n, t: (n, (t + 1) * ratio, 0, 0)),
            # Fused block-diagonal weight + folded BN params (resident; the
            # constant index map means they are only DMA'd once).
            pl.BlockSpec((K, Ctot), lambda n, t: (0, 0)),
            pl.BlockSpec((1, Ctot), lambda n, t: (0, 0)),
            pl.BlockSpec((1, Ctot), lambda n, t: (0, 0)),
        ],
        out_specs=pl.BlockSpec((1, tile_h, W, Ctot), lambda n, t: (n, t, 0, 0)),
        compiler_params=pltpu.CompilerParams(
            dimension_semantics=("parallel", "parallel"),
            vmem_limit_bytes=vmem_limit),
    )


class PPM:
    """JAX/Pallas port of the PyTorch PPM module (eval-mode BatchNorm)."""

    def __init__(self, chnn_in, rd_sc, dila, key, compute_dtype=jnp.bfloat16):
        self.chnn_in = chnn_in
        self.chnn = chnn_in // rd_sc
        self.dila = tuple(dila)
        self.eps = 1e-5
        self.compute_dtype = compute_dtype
        self.params = []
        for _ in self.dila:
            key, kw_, kg, kb, km, kv = jax.random.split(key, 6)
            # Conv2d weight, PyTorch layout (Cout, Cin, 3, 3), bias=False.
            w = jax.random.normal(kw_, (self.chnn, chnn_in, 3, 3),
                                  jnp.float32) * 0.1
            gamma = 1.0 + 0.1 * jax.random.normal(kg, (self.chnn,), jnp.float32)
            beta = 0.1 * jax.random.normal(kb, (self.chnn,), jnp.float32)
            mean = 0.1 * jax.random.normal(km, (self.chnn,), jnp.float32)
            var = jnp.abs(jax.random.normal(kv, (self.chnn,), jnp.float32)) + 0.5
            self.params.append(dict(w=w, gamma=gamma, beta=beta,
                                    running_mean=mean, running_var=var))

    def _fused_weights(self):
        """Block-diagonal im2col weight + concatenated folded BN scale/shift."""
        B, Cin, Cout = len(self.dila), self.chnn_in, self.chnn
        K, Ctot = B * 9 * Cin, B * Cout
        w_col = jnp.zeros((K, Ctot), jnp.float32)
        scales, shifts = [], []
        for b, p in enumerate(self.params):
            w_hwio = jnp.transpose(p["w"], (2, 3, 1, 0))      # (3,3,Cin,Cout)
            blk = w_hwio.reshape(9 * Cin, Cout)               # rows: (kh,kw,ci)
            w_col = w_col.at[b * 9 * Cin:(b + 1) * 9 * Cin,
                             b * Cout:(b + 1) * Cout].set(blk)
            s = p["gamma"] / jnp.sqrt(p["running_var"] + self.eps)
            scales.append(s)
            shifts.append(p["beta"] - p["running_mean"] * s)
        scale = jnp.concatenate(scales).reshape(1, Ctot).astype(jnp.float32)
        shift = jnp.concatenate(shifts).reshape(1, Ctot).astype(jnp.float32)
        return w_col.astype(self.compute_dtype), scale, shift

    def __call__(self, x, data_format="NCHW", tile_h=None):
        if data_format == "NCHW":
            x = jnp.transpose(x, (0, 2, 3, 1))
        N, H, W, C = x.shape
        assert C == self.chnn_in
        B, Cout = len(self.dila), self.chnn
        dmax = max(self.dila)
        halo = 2 * dmax

        # H tile: multiple of 2*dmax (halo-block granularity), big enough to
        # amortize per-step overhead, small enough for the v7x 64 MiB budget.
        if tile_h is None:
            tile_h = max(halo, (min(H, 128) // halo) * halo)
        tile_h = -(-tile_h // halo) * halo
        ht = -(-H // tile_h)
        h_pad = ht * tile_h

        # Pad ONCE with max(dila) (plus bottom rows so H tiles divide evenly);
        # cast to bf16 at the boundary so the MXU is fed bf16.
        x_pad = jnp.pad(x.astype(self.compute_dtype),
                        ((0, 0), (dmax, h_pad - H + dmax), (dmax, dmax), (0, 0)))

        w_col, scale, shift = self._fused_weights()

        call = _build_ppm_call(N, h_pad, W, self.chnn_in, self.dila, Cout,
                               tile_h, jnp.float32)
        # x_pad is passed twice: once for the main rows, once for the halo rows.
        y = call(x_pad, x_pad, w_col, scale, shift)   # (N, h_pad, W, B*Cout)
        y = y[:, :H]

        feats = []
        for b in range(B):
            f = y[..., b * Cout:(b + 1) * Cout]
            if data_format == "NCHW":
                f = jnp.transpose(f, (0, 3, 1, 2))
            feats.append(f)
        return feats


def _reference_branch(x_nchw, p, d, eps, compute_dtype=jnp.bfloat16):
    """Pure-JAX reference (lax.conv_general_dilated), same bf16-in/f32-acc."""
    y = jax.lax.conv_general_dilated(
        x_nchw.astype(compute_dtype), p["w"].astype(compute_dtype),
        window_strides=(1, 1), padding=[(d, d), (d, d)], rhs_dilation=(d, d),
        dimension_numbers=("NCHW", "OIHW", "NCHW"),
        preferred_element_type=jnp.float32)
    scale = p["gamma"] / jnp.sqrt(p["running_var"] + eps)
    shift = p["beta"] - p["running_mean"] * scale
    y = y * scale[None, :, None, None] + shift[None, :, None, None]
    return jnp.maximum(y, 0.0)


if __name__ == "__main__":
    key = jax.random.PRNGKey(0)
    k_param, k_x = jax.random.split(key)

    # Small shapes consistent with the module: chnn_in=4, rd_sc=2 -> chnn=2.
    N, chnn_in, H, W = 2, 4, 16, 16
    rd_sc = 2
    dila = (1, 2, 4)

    ppm = PPM(chnn_in, rd_sc, dila, k_param)
    x = jax.random.normal(k_x, (N, chnn_in, H, W), jnp.float32)

    # tile_h=8 -> 2 H-tiles per image, exercising the halo'd tiling path.
    feats = ppm(x, tile_h=8)
    feats = [jax.block_until_ready(f) for f in feats]

    # Verify against the pure-JAX reference (bf16 inputs, f32 accumulation).
    for f, d, p in zip(feats, dila, ppm.params):
        ref = _reference_branch(x, p, d, ppm.eps, ppm.compute_dtype)
        assert f.shape == (N, chnn_in // rd_sc, H, W), f.shape
        err = float(jnp.max(jnp.abs(f - ref)))
        assert jnp.allclose(f, ref, atol=2e-2, rtol=2e-2), (
            f"mismatch at dilation {d}: max abs err {err}")

    print("KERNEL_OK")
</pallas_src>

<mosaic_0001>
module attributes {stable_mosaic.version = 11 : i64} {
  func.func @_ppm_fused_kernel(%arg0: i32, %arg1: i32, %arg2: memref<1x8x24x4xbf16, #tpu.memory_space<vmem>>, %arg3: memref<1x8x24x4xbf16, #tpu.memory_space<vmem>>, %arg4: memref<108x6xbf16, #tpu.memory_space<vmem>>, %arg5: memref<1x6xf32, #tpu.memory_space<vmem>>, %arg6: memref<1x6xf32, #tpu.memory_space<vmem>>, %arg7: memref<1x8x16x6xf32, #tpu.memory_space<vmem>>) attributes {dimension_semantics = [#tpu.dimension_semantics<parallel>, #tpu.dimension_semantics<parallel>], iteration_bounds = array<i64: 2, 2>, scalar_prefetch = 0 : i64, scratch_operands = 0 : i64, tpu.core_type = #tpu.core_type<tc>, window_params = [{transform_indices = @transform_0, window_bounds = array<i64: 1, 8, 24, 4>}, {transform_indices = @transform_1, window_bounds = array<i64: 1, 8, 24, 4>}, {pipeline_mode = #tpu.pipeline_mode<synchronous>, transform_indices = @transform_2, window_bounds = array<i64: 108, 6>}, {pipeline_mode = #tpu.pipeline_mode<synchronous>, transform_indices = @transform_3, window_bounds = array<i64: 1, 6>}, {pipeline_mode = #tpu.pipeline_mode<synchronous>, transform_indices = @transform_4, window_bounds = array<i64: 1, 6>}, {transform_indices = @transform_5, window_bounds = array<i64: 1, 8, 16, 6>}]} {
    %c0 = arith.constant 0 : index
    %c0_0 = arith.constant 0 : index
    %c0_1 = arith.constant 0 : index
    %c0_2 = arith.constant 0 : index
    %0 = vector.load %arg2[%c0, %c0_0, %c0_1, %c0_2] : memref<1x8x24x4xbf16, #tpu.memory_space<vmem>>, vector<1x8x24x4xbf16>
    %1 = vector.shape_cast %0 : vector<1x8x24x4xbf16> to vector<8x24x4xbf16>
    %c0_3 = arith.constant 0 : index
    %c0_4 = arith.constant 0 : index
    %c0_5 = arith.constant 0 : index
    %c0_6 = arith.constant 0 : index
    %2 = vector.load %arg3[%c0_3, %c0_4, %c0_5, %c0_6] : memref<1x8x24x4xbf16, #tpu.memory_space<vmem>>, vector<1x8x24x4xbf16>
    %3 = vector.shape_cast %2 : vector<1x8x24x4xbf16> to vector<8x24x4xbf16>
    %4 = tpu.concatenate %1, %3 in 0 : vector<8x24x4xbf16>, vector<8x24x4xbf16> -> vector<16x24x4xbf16>
    %5 = vector.extract_strided_slice %4 {offsets = [3, 3, 0], sizes = [8, 16, 4], strides = [1, 1, 1]} : vector<16x24x4xbf16> to vector<8x16x4xbf16>
    %6 = vector.extract_strided_slice %4 {offsets = [3, 4, 0], sizes = [8, 16, 4], strides = [1, 1, 1]} : vector<16x24x4xbf16> to vector<8x16x4xbf16>
    %7 = vector.extract_strided_slice %4 {offsets = [3, 5, 0], sizes = [8, 16, 4], strides = [1, 1, 1]} : vector<16x24x4xbf16> to vector<8x16x4xbf16>
    %8 = vector.extract_strided_slice %4 {offsets = [4, 3, 0], sizes = [8, 16, 4], strides = [1, 1, 1]} : vector<16x24x4xbf16> to vector<8x16x4xbf16>
    %9 = vector.extract_strided_slice %4 {offsets = [4, 4, 0], sizes = [8, 16, 4], strides = [1, 1, 1]} : vector<16x24x4xbf16> to vector<8x16x4xbf16>
    %10 = vector.extract_strided_slice %4 {offsets = [4, 5, 0], sizes = [8, 16, 4], strides = [1, 1, 1]} : vector<16x24x4xbf16> to vector<8x16x4xbf16>
    %11 = vector.extract_strided_slice %4 {offsets = [5, 3, 0], sizes = [8, 16, 4], strides = [1, 1, 1]} : vector<16x24x4xbf16> to vector<8x16x4xbf16>
    %12 = vector.extract_strided_slice %4 {offsets = [5, 4, 0], sizes = [8, 16, 4], strides = [1, 1, 1]} : vector<16x24x4xbf16> to vector<8x16x4xbf16>
    %13 = vector.extract_strided_slice %4 {offsets = [5, 5, 0], sizes = [8, 16, 4], strides = [1, 1, 1]} : vector<16x24x4xbf16> to vector<8x16x4xbf16>
    %14 = vector.extract_strided_slice %4 {offsets = [2, 2, 0], sizes = [8, 16, 4], strides = [1, 1, 1]} : vector<16x24x4xbf16> to vector<8x16x4xbf16>
    %15 = vector.extract_strided_slice %4 {offsets = [2, 4, 0], sizes = [8, 16, 4], strides = [1, 1, 1]} : vector<16x24x4xbf16> to vector<8x16x4xbf16>
    %16 = vector.extract_strided_slice %4 {offsets = [2, 6, 0], sizes = [8, 16, 4], strides = [1, 1, 1]} : vector<16x24x4xbf16> to vector<8x16x4xbf16>
    %17 = vector.extract_strided_slice %4 {offsets = [4, 2, 0], sizes = [8, 16, 4], strides = [1, 1, 1]} : vector<16x24x4xbf16> to vector<8x16x4xbf16>
    %18 = vector.extract_strided_slice %4 {offsets = [4, 4, 0], sizes = [8, 16, 4], strides = [1, 1, 1]} : vector<16x24x4xbf16> to vector<8x16x4xbf16>
    %19 = vector.extract_strided_slice %4 {offsets = [4, 6, 0], sizes = [8, 16, 4], strides = [1, 1, 1]} : vector<16x24x4xbf16> to vector<8x16x4xbf16>
    %20 = vector.extract_strided_slice %4 {offsets = [6, 2, 0], sizes = [8, 16, 4], strides = [1, 1, 1]} : vector<16x24x4xbf16> to vector<8x16x4xbf16>
    %21 = vector.extract_strided_slice %4 {offsets = [6, 4, 0], sizes = [8, 16, 4], strides = [1, 1, 1]} : vector<16x24x4xbf16> to vector<8x16x4xbf16>
    %22 = vector.extract_strided_slice %4 {offsets = [6, 6, 0], sizes = [8, 16, 4], strides = [1, 1, 1]} : vector<16x24x4xbf16> to vector<8x16x4xbf16>
    %23 = vector.extract_strided_slice %4 {offsets = [0, 0, 0], sizes = [8, 16, 4], strides = [1, 1, 1]} : vector<16x24x4xbf16> to vector<8x16x4xbf16>
    %24 = vector.extract_strided_slice %4 {offsets = [0, 4, 0], sizes = [8, 16, 4], strides = [1, 1, 1]} : vector<16x24x4xbf16> to vector<8x16x4xbf16>
    %25 = vector.extract_strided_slice %4 {offsets = [0, 8, 0], sizes = [8, 16, 4], strides = [1, 1, 1]} : vector<16x24x4xbf16> to vector<8x16x4xbf16>
    %26 = vector.extract_strided_slice %4 {offsets = [4, 0, 0], sizes = [8, 16, 4], strides = [1, 1, 1]} : vector<16x24x4xbf16> to vector<8x16x4xbf16>
    %27 = vector.extract_strided_slice %4 {offsets = [4, 4, 0], sizes = [8, 16, 4], strides = [1, 1, 1]} : vector<16x24x4xbf16> to vector<8x16x4xbf16>
    %28 = vector.extract_strided_slice %4 {offsets = [4, 8, 0], sizes = [8, 16, 4], strides = [1, 1, 1]} : vector<16x24x4xbf16> to vector<8x16x4xbf16>
    %29 = vector.extract_strided_slice %4 {offsets = [8, 0, 0], sizes = [8, 16, 4], strides = [1, 1, 1]} : vector<16x24x4xbf16> to vector<8x16x4xbf16>
    %30 = vector.extract_strided_slice %4 {offsets = [8, 4, 0], sizes = [8, 16, 4], strides = [1, 1, 1]} : vector<16x24x4xbf16> to vector<8x16x4xbf16>
    %31 = vector.extract_strided_slice %4 {offsets = [8, 8, 0], sizes = [8, 16, 4], strides = [1, 1, 1]} : vector<16x24x4xbf16> to vector<8x16x4xbf16>
    %32 = tpu.concatenate %5, %6, %7, %8, %9, %10, %11, %12, %13, %14, %15, %16, %17, %18, %19, %20 in 2 : vector<8x16x4xbf16>, vector<8x16x4xbf16>, vector<8x16x4xbf16>, vector<8x16x4xbf16>, vector<8x16x4xbf16>, vector<8x16x4xbf16>, vector<8x16x4xbf16>, vector<8x16x4xbf16>, vector<8x16x4xbf16>, vector<8x16x4xbf16>, vector<8x16x4xbf16>, vector<8x16x4xbf16>, vector<8x16x4xbf16>, vector<8x16x4xbf16>, vector<8x16x4xbf16>, vector<8x16x4xbf16> -> vector<8x16x64xbf16>
    %33 = tpu.concatenate %21, %22, %23, %24, %25, %26, %27, %28, %29, %30, %31 in 2 : vector<8x16x4xbf16>, vector<8x16x4xbf16>, vector<8x16x4xbf16>, vector<8x16x4xbf16>, vector<8x16x4xbf16>, vector<8x16x4xbf16>, vector<8x16x4xbf16>, vector<8x16x4xbf16>, vector<8x16x4xbf16>, vector<8x16x4xbf16>, vector<8x16x4xbf16> -> vector<8x16x44xbf16>
    %34 = tpu.concatenate %32, %33 in 2 : vector<8x16x64xbf16>, vector<8x16x44xbf16> -> vector<8x16x108xbf16>
    %35 = vector.shape_cast %34 : vector<8x16x108xbf16> to vector<128x108xbf16>
    %c0_7 = arith.constant 0 : index
    %c0_8 = arith.constant 0 : index
    %36 = vector.load %arg4[%c0_7, %c0_8] : memref<108x6xbf16, #tpu.memory_space<vmem>>, vector<108x6xbf16>
    %cst = arith.constant dense<0.000000e+00> : vector<128x6xf32>
    %37 = tpu.matmul %35, %36, %cst {dimension_numbers = #tpu.dot_dimension_numbers<[1], [0], [0], [1], [0, 0, 1, 1], [], []>} : vector<128x108xbf16>, vector<108x6xbf16>, vector<128x6xf32> -> vector<128x6xf32>
    %c0_9 = arith.constant 0 : index
    %c0_10 = arith.constant 0 : index
    %38 = vector.load %arg5[%c0_9, %c0_10] : memref<1x6xf32, #tpu.memory_space<vmem>>, vector<1x6xf32>
    %39 = vector.broadcast %38 : vector<1x6xf32> to vector<128x6xf32>
    %40 = arith.mulf %37, %39 : vector<128x6xf32>
    %c0_11 = arith.constant 0 : index
    %c0_12 = arith.constant 0 : index
    %41 = vector.load %arg6[%c0_11, %c0_12] : memref<1x6xf32, #tpu.memory_space<vmem>>, vector<1x6xf32>
    %42 = vector.broadcast %41 : vector<1x6xf32> to vector<128x6xf32>
    %43 = arith.addf %40, %42 : vector<128x6xf32>
    %cst_13 = arith.constant 0.000000e+00 : f32
    %44 = vector.broadcast %cst_13 : f32 to vector<128x6xf32>
    %45 = arith.maximumf %43, %44 : vector<128x6xf32>
    %46 = vector.shape_cast %45 : vector<128x6xf32> to vector<1x8x16x6xf32>
    %c0_14 = arith.constant 0 : index
    %c0_15 = arith.constant 0 : index
    %c0_16 = arith.constant 0 : index
    %c0_17 = arith.constant 0 : index
    %47 = vector.load %arg7[%c0_14, %c0_15, %c0_16, %c0_17] : memref<1x8x16x6xf32, #tpu.memory_space<vmem>>, vector<1x8x16x6xf32>
    tpu.vector_store %arg7[%c0_14, %c0_15, %c0_16, %c0_17], %46 {strides = array<i32>} : memref<1x8x16x6xf32, #tpu.memory_space<vmem>>, vector<1x8x16x6xf32>,
    return
  }
  func.func @transform_0(%arg0: i32, %arg1: i32) -> (i32, i32, i32, i32) {
    %c0_i32 = arith.constant 0 : i32
    %c0_i32_0 = arith.constant 0 : i32
    %c0_i32_1 = arith.constant 0 : i32
    return %arg0, %arg1, %c0_i32, %c0_i32_0 : i32, i32, i32, i32
  }
  func.func @transform_1(%arg0: i32, %arg1: i32) -> (i32, i32, i32, i32) {
    %c1_i32 = arith.constant 1 : i32
    %0 = arith.addi %arg1, %c1_i32 : i32
    %c1_i32_0 = arith.constant 1 : i32
    %1 = arith.muli %0, %c1_i32_0 : i32
    %c0_i32 = arith.constant 0 : i32
    %c0_i32_1 = arith.constant 0 : i32
    %c0_i32_2 = arith.constant 0 : i32
    return %arg0, %1, %c0_i32, %c0_i32_1 : i32, i32, i32, i32
  }
  func.func @transform_2(%arg0: i32, %arg1: i32) -> (i32, i32) {
    %c0_i32 = arith.constant 0 : i32
    %c0_i32_0 = arith.constant 0 : i32
    %c0_i32_1 = arith.constant 0 : i32
    return %c0_i32, %c0_i32_0 : i32, i32
  }
  func.func @transform_3(%arg0: i32, %arg1: i32) -> (i32, i32) {
    %c0_i32 = arith.constant 0 : i32
    %c0_i32_0 = arith.constant 0 : i32
    %c0_i32_1 = arith.constant 0 : i32
    return %c0_i32, %c0_i32_0 : i32, i32
  }
  func.func @transform_4(%arg0: i32, %arg1: i32) -> (i32, i32) {
    %c0_i32 = arith.constant 0 : i32
    %c0_i32_0 = arith.constant 0 : i32
    %c0_i32_1 = arith.constant 0 : i32
    return %c0_i32, %c0_i32_0 : i32, i32
  }
  func.func @transform_5(%arg0: i32, %arg1: i32) -> (i32, i32, i32, i32) {
    %c0_i32 = arith.constant 0 : i32
    %c0_i32_0 = arith.constant 0 : i32
    %c0_i32_1 = arith.constant 0 : i32
    return %arg0, %arg1, %c0_i32, %c0_i32_0 : i32, i32, i32, i32
  }
}

</mosaic_0001>

<llo_original>
// kernel: tpu_custom_call.1
$region0: #{tpu_custom_call.1}
  #allocation0 [shape = 'u32[]', space=smem, size = 0x4, offset = 0x4, fixed_abs, tag = 'smem constant byte address 0x4 - core index']
  #allocation1 [shape = 'u32[144,128]{1,0:T(1,128)}', space=vmem, size = 0x12000, scoped, tag = 'internal scratch']
  %s0 = inlined_call_operand.vmem [shape: bf16[2,24,24,4], index: 0, kind: input, shape index: {}]
  %s1 = inlined_call_operand.vmem [shape: bf16[2,24,24,4], index: 1, kind: input, shape index: {}]
  %s2 = inlined_call_operand.vmem [shape: bf16[108,6], index: 2, kind: input, shape index: {}]
  %s3 = inlined_call_operand.vmem [shape: f32[1,6], index: 3, kind: input, shape index: {}]
  %s4 = inlined_call_operand.vmem [shape: f32[1,6], index: 4, kind: input, shape index: {}]
  %s5 = inlined_call_operand.vmem [shape: f32[2,16,16,6], index: 5, kind: output, shape index: {}]
  %s6 = sld [smem:[#allocation0]]
  $region53: #{tpu_custom_call.1} parent=0
    _
  %s8 = ssub.s32 1, %s6
  %s9 = scalar_select 0, %s8, %s6
  loop: start=0, step=1, limit=6
  $region2: #{tpu_custom_call.1} parent=0 // loop_pre_header
    _
  $region3: #{tpu_custom_call.1} parent=0 // loop_header
    %s11 = sphi 0, %s15
    %p12 = scmp.ge.s32.totalorder %s11, 6
    %s18 = sphi 0, %s30
    %s19 = sphi 0, %s26
    %s20 = sphi 0, %s18
    %s21 = sphi 0, %s19
    %s22 = sphi 0, %s20
    %s23 = sphi 0, %s21
    %s35 = sphi 0, %s37
    %s38 = sphi 0, %s35
    %s39 = sphi 0, %s38
    %s55 = sphi 0, %s39
    %s65 = sphi 0, %s67
    %s68 = sphi 0, %s65
    %s69 = sphi 0, %s68
    %s85 = sphi 0, %s69
    %s89 = sphi 0, %s89
    %s91 = sphi 0, %s89
    %s92 = sphi 0, %s91
    %s106 = sphi 0, %s92
    %s110 = sphi 0, %s110
    %s112 = sphi 0, %s110
    %s113 = sphi 0, %s112
    %s127 = sphi 0, %s113
    %s131 = sphi 0, %s131
    %s133 = sphi 0, %s131
    %s134 = sphi 0, %s133
    %s148 = sphi 0, %s134
    %s156 = sphi 0, %s158
    %s159 = sphi 0, %s156
    %s160 = sphi 0, %s159
    %s176 = sphi 0, %s160
  $region4: #{tpu_custom_call.1} parent=0 // loop_header_branch
    %14 = sbr.rel (%p12) target = $region8
  $region5: #{tpu_custom_call.1} parent=0 // loop_body
    %s16 = ssub.s32 %s11, 1
    %s17 = ssub.s32 %s11, 2
    %s24 = sadd.s32 1, %s19
    %p25 = scmp.ge.s32.totalorder %s24, 2
    %s26 = scalar_select %p25, 0, %s24
    %s27 = sadd.s32 1, %s18
    %s28 = scalar_select %p25, %s27, %s18
    %p29 = scmp.ge.s32.totalorder %s28, 2
    %s30 = scalar_select %p29, 0, %s28
    %s31 = ssub.s32 %s18, %s30
    %s32 = ssub.s32 %s19, %s26
    %s33 = sor.u32 %s31, %s32
    %p34 = scmp.eq.s32.totalorder %s33, 0
    %s36 = sadd.s32 %s35, 1
    %s37 = scalar_select %p34, %s35, %s36
    %p40 = pneg %p34
    %p41 = scmp.eq.s32.totalorder %s11, 3
    %p42 = por %p40, %p41
    %p43 = scmp.ne.s32.totalorder %s35, %s38
    %p44 = scmp.eq.s32.totalorder %s11, 0
    %p45 = por %p43, %p44
    %p46 = scmp.ne.s32.totalorder %s35, %s38
    %p47 = scmp.eq.s32.totalorder %s16, 3
    %p48 = por %p46, %p47
    %p49 = scmp.ne.s32.totalorder %s38, %s39
    %p50 = scmp.eq.s32.totalorder %s16, 0
    %p51 = por %p49, %p50
    %p52 = scmp.ne.s32.totalorder %s38, %s39
    %p53 = scmp.eq.s32.totalorder %s17, 3
    %p54 = por %p52, %p53
    %p56 = scmp.ne.s32.totalorder %s39, %s55
    %p57 = scmp.eq.s32.totalorder %s17, 0
    %p58 = por %p56, %p57
    %s59 = sadd.s32 %s19, 1
    %s60 = sadd.s32 %s26, 1
    %s61 = ssub.s32 %s18, %s30
    %s62 = ssub.s32 %s59, %s60
    %s63 = sor.u32 %s61, %s62
    %p64 = scmp.eq.s32.totalorder %s63, 0
    %s66 = sadd.s32 %s65, 1
    %s67 = scalar_select %p64, %s65, %s66
    %p70 = pneg %p64
    %p71 = scmp.eq.s32.totalorder %s11, 3
    %p72 = por %p70, %p71
    %p73 = scmp.ne.s32.totalorder %s65, %s68
    %p74 = scmp.eq.s32.totalorder %s11, 0
    %p75 = por %p73, %p74
    %p76 = scmp.ne.s32.totalorder %s65, %s68
    %p77 = scmp.eq.s32.totalorder %s16, 3
    %p78 = por %p76, %p77
    %p79 = scmp.ne.s32.totalorder %s68, %s69
    %p80 = scmp.eq.s32.totalorder %s16, 0
    %p81 = por %p79, %p80
    %p82 = scmp.ne.s32.totalorder %s68, %s69
    %p83 = scmp.eq.s32.totalorder %s17, 3
    %p84 = por %p82, %p83
    %p86 = scmp.ne.s32.totalorder %s69, %s85
    %p87 = scmp.eq.s32.totalorder %s17, 0
    %p88 = por %p86, %p87
    %s90 = sadd.s32 %s89, 1
    %p93 = scmp.eq.s32.totalorder %s11, 3
    %p94 = scmp.ne.s32.totalorder %s89, %s91
    %p95 = scmp.eq.s32.totalorder %s11, 0
    %p96 = por %p94, %p95
    %p97 = scmp.ne.s32.totalorder %s89, %s91
    %p98 = scmp.eq.s32.totalorder %s16, 3
    %p99 = por %p97, %p98
    %p100 = scmp.ne.s32.totalorder %s91, %s92
    %p101 = scmp.eq.s32.totalorder %s16, 0
    %p102 = por %p100, %p101
    %p103 = scmp.ne.s32.totalorder %s91, %s92
    %p104 = scmp.eq.s32.totalorder %s17, 3
    %p105 = por %p103, %p104
    %p107 = scmp.ne.s32.totalorder %s92, %s106
    %p108 = scmp.eq.s32.totalorder %s17, 0
    %p109 = por %p107, %p108
    %s111 = sadd.s32 %s110, 1
    %p114 = scmp.eq.s32.totalorder %s11, 3
    %p115 = scmp.ne.s32.totalorder %s110, %s112
    %p116 = scmp.eq.s32.totalorder %s11, 0
    %p117 = por %p115, %p116
    %p118 = scmp.ne.s32.totalorder %s110, %s112
    %p119 = scmp.eq.s32.totalorder %s16, 3
    %p120 = por %p118, %p119
    %p121 = scmp.ne.s32.totalorder %s112, %s113
    %p122 = scmp.eq.s32.totalorder %s16, 0
    %p123 = por %p121, %p122
    %p124 = scmp.ne.s32.totalorder %s112, %s113
    %p125 = scmp.eq.s32.totalorder %s17, 3
    %p126 = por %p124, %p125
    %p128 = scmp.ne.s32.totalorder %s113, %s127
    %p129 = scmp.eq.s32.totalorder %s17, 0
    %p130 = por %p128, %p129
    %s132 = sadd.s32 %s131, 1
    %p135 = scmp.eq.s32.totalorder %s11, 3
    %p136 = scmp.ne.s32.totalorder %s131, %s133
    %p137 = scmp.eq.s32.totalorder %s11, 0
    %p138 = por %p136, %p137
    %p139 = scmp.ne.s32.totalorder %s131, %s133
    %p140 = scmp.eq.s32.totalorder %s16, 3
    %p141 = por %p139, %p140
    %p142 = scmp.ne.s32.totalorder %s133, %s134
    %p143 = scmp.eq.s32.totalorder %s16, 0
    %p144 = por %p142, %p143
    %p145 = scmp.ne.s32.totalorder %s133, %s134
    %p146 = scmp.eq.s32.totalorder %s17, 3
    %p147 = por %p145, %p146
    %p149 = scmp.ne.s32.totalorder %s134, %s148
    %p150 = scmp.eq.s32.totalorder %s17, 0
    %p151 = por %p149, %p150
    %s152 = ssub.s32 %s18, %s30
    %s153 = ssub.s32 %s19, %s26
    %s154 = sor.u32 %s152, %s153
    %p155 = scmp.eq.s32.totalorder %s154, 0
    %s157 = sadd.s32 %s156, 1
    %s158 = scalar_select %p155, %s156, %s157
    %p161 = pneg %p155
    %p162 = scmp.eq.s32.totalorder %s11, 3
    %p163 = por %p161, %p162
    %p164 = scmp.ne.s32.totalorder %s156, %s159
    %p165 = scmp.eq.s32.totalorder %s11, 0
    %p166 = por %p164, %p165
    %p167 = scmp.ne.s32.totalorder %s156, %s159
    %p168 = scmp.eq.s32.totalorder %s16, 3
    %p169 = por %p167, %p168
    %p170 = scmp.ne.s32.totalorder %s159, %s160
    %p171 = scmp.eq.s32.totalorder %s16, 0
    %p172 = por %p170, %p171
    %p173 = scmp.ne.s32.totalorder %s159, %s160
    %p174 = scmp.eq.s32.totalorder %s17, 3
    %p175 = por %p173, %p174
    %p177 = scmp.ne.s32.totalorder %s160, %s176
    %p178 = scmp.eq.s32.totalorder %s17, 0
    %p179 = por %p177, %p178
    %p180 = scmp.le.s32.totalorder 1, %s11
    %p181 = scmp.lt.s32.totalorder %s11, 5
    %p182 = pnand %p180, %p181
    %p183 = pneg %p182
    // Predicated region
    $region9: #{tpu_custom_call.1} parent=5 // pred_check
      _
    $region10: #{tpu_custom_call.1} parent=5 // pred_check_branch
      %185 = sbr.rel (%p182) target = $region12
    $region11: #{tpu_custom_call.1} parent=5 // pred_region
      %s186 = ssub.s32 %s11, 1
      // Predicated region
      $region13: #{tpu_custom_call.1} parent=11 // pred_check
        %p187 = pneg %p102
      $region14: #{tpu_custom_call.1} parent=11 // pred_check_branch
        %189 = sbr.rel (%p187) target = $region16
      $region15: #{tpu_custom_call.1} parent=11 // pred_region
        _
      $region16: #{tpu_custom_call.1} parent=11 // pred_fallthru
        _
      // Predicated region
      $region17: #{tpu_custom_call.1} parent=11 // pred_check
        %p190 = pneg %p123
      $region18: #{tpu_custom_call.1} parent=11 // pred_check_branch
        %192 = sbr.rel (%p190) target = $region20
      $region19: #{tpu_custom_call.1} parent=11 // pred_region
        _
      $region20: #{tpu_custom_call.1} parent=11 // pred_fallthru
        _
      // Predicated region
      $region21: #{tpu_custom_call.1} parent=11 // pred_check
        %p193 = pneg %p144
      $region22: #{tpu_custom_call.1} parent=11 // pred_check_branch
        %195 = sbr.rel (%p193) target = $region24
      $region23: #{tpu_custom_call.1} parent=11 // pred_region
        _
      $region24: #{tpu_custom_call.1} parent=11 // pred_fallthru
        _
    $region12: #{tpu_custom_call.1} parent=5 // pred_fallthru
      _
    %p196 = scmp.lt.s32.totalorder %s11, 4
    // Predicated region
    $region25: #{tpu_custom_call.1} parent=5 // pred_check
      %p197 = pneg %p196
    $region26: #{tpu_custom_call.1} parent=5 // pred_check_branch
      %199 = sbr.rel (%p197) target = $region28
    $region27: #{tpu_custom_call.1} parent=5 // pred_region
      // Predicated region
      $region29: #{tpu_custom_call.1} parent=27 // pred_check
        %p200 = pneg %p45
      $region30: #{tpu_custom_call.1} parent=27 // pred_check_branch
        %202 = sbr.rel (%p200) target = $region32
      $region31: #{tpu_custom_call.1} parent=27 // pred_region
        %s203 = smul.u32 8, %s19
        %p204 = scmp.lt.s32.totalorder %s18, 1
        %s205 = scalar_select %p204, %s18, 1
        %p206 = scmp.lt.s32.totalorder %s203, 23
        %s207 = scalar_select %p206, %s203, 23
        %s208 = smul.addr %s207, 3
        %s209 = smul.addr %s205, 72
        %s210 = sadd.s32 %s208, %s209
        %s211 = smul.addr %s210, 4
        %s212 = scalar_lea.vmem %s0, %s211
        %s213 = smul.u32 8, %s19
      $region32: #{tpu_custom_call.1} parent=27 // pred_fallthru
        _
      // Predicated region
      $region33: #{tpu_custom_call.1} parent=27 // pred_check
        %p214 = pneg %p75
      $region34: #{tpu_custom_call.1} parent=27 // pred_check_branch
        %216 = sbr.rel (%p214) target = $region36
      $region35: #{tpu_custom_call.1} parent=27 // pred_region
        %s217 = sadd.s32 %s19, 1
        %s218 = smul.u32 8, %s217
        %p219 = scmp.lt.s32.totalorder %s18, 1
        %s220 = scalar_select %p219, %s18, 1
        %p221 = scmp.lt.s32.totalorder %s218, 23
        %s222 = scalar_select %p221, %s218, 23
        %s223 = smul.addr %s222, 3
        %s224 = smul.addr %s220, 72
        %s225 = sadd.s32 %s223, %s224
        %s226 = smul.addr %s225, 4
        %s227 = scalar_lea.vmem %s1, %s226
        %s228 = sadd.s32 %s19, 1
        %s229 = smul.u32 8, %s228
      $region36: #{tpu_custom_call.1} parent=27 // pred_fallthru
        _
    $region28: #{tpu_custom_call.1} parent=5 // pred_fallthru
      _
    %p230 = scmp.le.s32.totalorder 1, %s11
    %p231 = scmp.lt.s32.totalorder %s11, 5
    %p232 = pnand %p230, %p231
    %p233 = pneg %p232
    // Predicated region
    $region37: #{tpu_custom_call.1} parent=5 // pred_check
      _
    $region38: #{tpu_custom_call.1} parent=5 // pred_check_branch
      %235 = sbr.rel (%p232) target = $region40
    $region39: #{tpu_custom_call.1} parent=5 // pred_region
      %s236 = ssub.s32 %s11, 1
      %s237 = smul.u32 8, %s21
      %p238 = scmp.lt.s32.totalorder %s20, 1
      %s239 = scalar_select %p238, %s20, 1
      %p240 = scmp.lt.s32.totalorder %s237, 23
      %s241 = scalar_select %p240, %s237, 23
      %s242 = smul.addr %s241, 3
      %s243 = smul.addr %s239, 72
      %s244 = sadd.s32 %s242, %s243
      %s245 = smul.addr %s244, 4
      %s246 = scalar_lea.vmem %s0, %s245
      %p247 = pneg %p51
      %p248 = pneg %p48
      %s249 = sadd.s32 %s21, 1
      %s250 = smul.u32 8, %s249
      %p251 = scmp.lt.s32.totalorder %s20, 1
      %s252 = scalar_select %p251, %s20, 1
      %p253 = scmp.lt.s32.totalorder %s250, 23
      %s254 = scalar_select %p253, %s250, 23
      %s255 = smul.addr %s254, 3
      %s256 = smul.addr %s252, 72
      %s257 = sadd.s32 %s255, %s256
      %s258 = smul.addr %s257, 4
      %s259 = scalar_lea.vmem %s1, %s258
      %p260 = pneg %p81
      %p261 = pneg %p78
      %p262 = pneg %p102
      %p263 = pneg %p99
      %p264 = pneg %p123
      %p265 = pneg %p120
      %p266 = pneg %p144
      %p267 = pneg %p141
      %p268 = pneg %p172
      %p269 = pneg %p169
      %s270 = smul.u32 8, %s21
      %p271 = scmp.lt.s32.totalorder %s20, 1
      %s272 = scalar_select %p271, %s20, 1
      %p273 = scmp.lt.s32.totalorder %s270, 15
      %s274 = scalar_select %p273, %s270, 15
      %s275 = smul.addr %s274, 2
      %s276 = smul.addr %s272, 32
      %s277 = sadd.s32 %s275, %s276
      %s278 = smul.addr %s277, 8
      %s279 = scalar_lea.vmem %s5, %s278
      %s280 = smul.u32 8, %s21
      %p281 = scmp.lt.s32.totalorder %s20, 1
      %s282 = scalar_select %p281, %s20, 1
      %p283 = scmp.lt.s32.totalorder %s280, 23
      %s284 = scalar_select %p283, %s280, 23
      %s285 = smul.addr %s284, 3
      %s286 = smul.addr %s282, 72
      %s287 = sadd.s32 %s285, %s286
      %s288 = smul.addr %s287, 4
      %s289 = scalar_lea.vmem %s0, %s288
      %s290 = smul.u32 8, %s21
      %s291 = sadd.s32 %s21, 1
      %s292 = smul.u32 8, %s291
      %p293 = scmp.lt.s32.totalorder %s20, 1
      %s294 = scalar_select %p293, %s20, 1
      %p295 = scmp.lt.s32.totalorder %s292, 23
      %s296 = scalar_select %p295, %s292, 23
      %s297 = smul.addr %s296, 3
      %s298 = smul.addr %s294, 72
      %s299 = sadd.s32 %s297, %s298
      %s300 = smul.addr %s299, 4
      %s301 = scalar_lea.vmem %s1, %s300
      %s302 = sadd.s32 %s21, 1
      %s303 = smul.u32 8, %s302
      %s304 = smul.u32 8, %s21
      %p305 = scmp.lt.s32.totalorder %s20, 1
      %s306 = scalar_select %p305, %s20, 1
      %p307 = scmp.lt.s32.totalorder %s304, 15
      %s308 = scalar_select %p307, %s304, 15
      %s309 = smul.addr %s308, 2
      %s310 = smul.addr %s306, 32
      %s311 = sadd.s32 %s309, %s310
      %s312 = smul.addr %s311, 8
      %s313 = scalar_lea.vmem %s5, %s312
      %s314 = smul.u32 8, %s21
      %v316 = vld [vmem:[%s289] sm:$0xf]
      %v317 = vld [vmem:[%s289 + $0x4] sm:$0xf]
      %v318 = vld [vmem:[%s289 + $0x8] sm:$0xf]
      %v319 = vld [vmem:[%s289 + $0xc] sm:$0xf]
      %v320 = vld [vmem:[%s289 + $0x10] sm:$0xf]
      %v321 = vld [vmem:[%s289 + $0x14] sm:$0xf]
      %v322 = vld [vmem:[%s289 + $0x18] sm:$0xf]
      %v323 = vld [vmem:[%s289 + $0x1c] sm:$0xf]
      %v324 = vld [vmem:[%s289 + $0x20] sm:$0xf]
      %v325 = vld [vmem:[%s289 + $0x24] sm:$0xf]
      %v326 = vld [vmem:[%s289 + $0x28] sm:$0xf]
      %v327 = vld [vmem:[%s289 + $0x2c] sm:$0xf]
      %v328 = vld [vmem:[%s289 + $0x30] sm:$0xf]
      %v329 = vld [vmem:[%s289 + $0x34] sm:$0xf]
      %v330 = vld [vmem:[%s289 + $0x38] sm:$0xf]
      %v331 = vld [vmem:[%s289 + $0x3c] sm:$0xf]
      %v332 = vld [vmem:[%s289 + $0x40] sm:$0xf]
      %v333 = vld [vmem:[%s289 + $0x44] sm:$0xf]
      %v334 = vld [vmem:[%s289 + $0x48] sm:$0xf]
      %v335 = vld [vmem:[%s289 + $0x4c] sm:$0xf]
      %v336 = vld [vmem:[%s289 + $0x50] sm:$0xf]
      %v337 = vld [vmem:[%s289 + $0x54] sm:$0xf]
      %v338 = vld [vmem:[%s289 + $0x58] sm:$0xf]
      %v339 = vld [vmem:[%s289 + $0x5c] sm:$0xf]
      %v340 = vld [vmem:[%s301] sm:$0xf]
      %v341 = vld [vmem:[%s301 + $0x4] sm:$0xf]
      %v342 = vld [vmem:[%s301 + $0x8] sm:$0xf]
      %v343 = vld [vmem:[%s301 + $0xc] sm:$0xf]
      %v344 = vld [vmem:[%s301 + $0x10] sm:$0xf]
      %v345 = vld [vmem:[%s301 + $0x14] sm:$0xf]
      %v346 = vld [vmem:[%s301 + $0x18] sm:$0xf]
      %v347 = vld [vmem:[%s301 + $0x1c] sm:$0xf]
      %v348 = vld [vmem:[%s301 + $0x20] sm:$0xf]
      %v349 = vld [vmem:[%s301 + $0x24] sm:$0xf]
      %v350 = vld [vmem:[%s301 + $0x28] sm:$0xf]
      %v351 = vld [vmem:[%s301 + $0x2c] sm:$0xf]
      %v352 = vld [vmem:[%s301 + $0x30] sm:$0xf]
      %v353 = vld [vmem:[%s301 + $0x34] sm:$0xf]
      %v354 = vld [vmem:[%s301 + $0x38] sm:$0xf]
      %v355 = vld [vmem:[%s301 + $0x3c] sm:$0xf]
      %v356 = vld [vmem:[%s301 + $0x40] sm:$0xf]
      %v357 = vld [vmem:[%s301 + $0x44] sm:$0xf]
      %v358 = vld [vmem:[%s301 + $0x48] sm:$0xf]
      %v359 = vld [vmem:[%s301 + $0x4c] sm:$0xf]
      %v360 = vld [vmem:[%s301 + $0x50] sm:$0xf]
      %v361 = vld [vmem:[%s301 + $0x54] sm:$0xf]
      %v362 = vld [vmem:[%s301 + $0x58] sm:$0xf]
      %v363 = vld [vmem:[%s301 + $0x5c] sm:$0xf]
      %v388 = vunpack.c.l.b16 %v325
      %v389 = vunpack.c.l.b16 %v326
      %v390 = vunpack.c.l.b16 %v327
      %v391 = vunpack.c.l.b16 %v328
      %v392 = vunpack.c.l.b16 %v329
      %v393 = vunpack.c.l.b16 %v330
      %v394 = vunpack.c.l.b16 %v331
      %v395 = vunpack.c.l.b16 %v332
      %v396 = vunpack.c.l.b16 %v333
      %v397 = vunpack.c.l.b16 %v334
      %v398 = vunpack.c.l.b16 %v335
      %v399 = vunpack.c.l.b16 %v336
      %v400 = vunpack.c.l.b16 %v337
      %v401 = vunpack.c.l.b16 %v338
      %v402 = vunpack.c.l.b16 %v339
      %v403 = vunpack.c.l.b16 %v340
      %v404 = vunpack.c.l.b16 %v341
      %v405 = vunpack.c.l.b16 %v342
      %v406 = vunpack.c.l.b16 %v343
      %v407 = vunpack.c.l.b16 %v344
      %v408 = vunpack.c.l.b16 %v345
      %v409 = vunpack.c.l.b16 %v346
      %v410 = vunpack.c.l.b16 %v347
      %v411 = vunpack.c.l.b16 %v348
      %v412 = vpack.c.b16 %v389, %v388
      %v413 = vpack.c.b16 %v390, %v390
      %v414 = vpack.c.b16 %v392, %v391
      %v415 = vpack.c.b16 %v393, %v393
      %v416 = vpack.c.b16 %v395, %v394
      %v417 = vpack.c.b16 %v396, %v396
      %v418 = vpack.c.b16 %v398, %v397
      %v419 = vpack.c.b16 %v399, %v399
      %v420 = vpack.c.b16 %v401, %v400
      %v421 = vpack.c.b16 %v402, %v402
      %v422 = vpack.c.b16 %v404, %v403
      %v423 = vpack.c.b16 %v405, %v405
      %v424 = vpack.c.b16 %v407, %v406
      %v425 = vpack.c.b16 %v408, %v408
      %v426 = vpack.c.b16 %v410, %v409
      %v427 = vpack.c.b16 %v411, %v411
      %vm428 = vsmask.f32 7424
      %v430 = vshrl.u32 %v412, 16
      %v432 = vshll.u32 %v412, 16
      %v434 = vrot.slane %v432, 1
      %v435 = vor.u32 %v430, %v434
      %v437 = vshll.u32 %v413, 16
      %v439 = vrot.slane %v437, 1
      %v440 = vsel %vm428, %v435, %v439
      %v441 = vshrl.u32 %v413, 16
      %v443 = vor.u32 %v441, %v439
      %v445 = vshrl.u32 %v414, 16
      %v447 = vshll.u32 %v414, 16
      %v449 = vrot.slane %v447, 1
      %v450 = vor.u32 %v445, %v449
      %v452 = vshll.u32 %v415, 16
      %v454 = vrot.slane %v452, 1
      %v455 = vsel %vm428, %v450, %v454
      %v456 = vshrl.u32 %v415, 16
      %v458 = vor.u32 %v456, %v454
      %v460 = vshrl.u32 %v416, 16
      %v462 = vshll.u32 %v416, 16
      %v464 = vrot.slane %v462, 1
      %v465 = vor.u32 %v460, %v464
      %v467 = vshll.u32 %v417, 16
      %v469 = vrot.slane %v467, 1
      %v470 = vsel %vm428, %v465, %v469
      %v471 = vshrl.u32 %v417, 16
      %v473 = vor.u32 %v471, %v469
      %v475 = vshrl.u32 %v418, 16
      %v477 = vshll.u32 %v418, 16
      %v479 = vrot.slane %v477, 1
      %v480 = vor.u32 %v475, %v479
      %v482 = vshll.u32 %v419, 16
      %v484 = vrot.slane %v482, 1
      %v485 = vsel %vm428, %v480, %v484
      %v486 = vshrl.u32 %v419, 16
      %v488 = vor.u32 %v486, %v484
      %v490 = vshrl.u32 %v420, 16
      %v492 = vshll.u32 %v420, 16
      %v494 = vrot.slane %v492, 1
      %v495 = vor.u32 %v490, %v494
      %v497 = vshll.u32 %v421, 16
      %v499 = vrot.slane %v497, 1
      %v500 = vsel %vm428, %v495, %v499
      %v501 = vshrl.u32 %v421, 16
      %v503 = vor.u32 %v501, %v499
      %v505 = vshrl.u32 %v422, 16
      %v507 = vshll.u32 %v422, 16
      %v509 = vrot.slane %v507, 1
      %v510 = vor.u32 %v505, %v509
      %v512 = vshll.u32 %v423, 16
      %v514 = vrot.slane %v512, 1
      %v515 = vsel %vm428, %v510, %v514
      %v516 = vshrl.u32 %v423, 16
      %v518 = vor.u32 %v516, %v514
      %v520 = vshrl.u32 %v424, 16
      %v522 = vshll.u32 %v424, 16
      %v524 = vrot.slane %v522, 1
      %v525 = vor.u32 %v520, %v524
      %v527 = vshll.u32 %v425, 16
      %v529 = vrot.slane %v527, 1
      %v530 = vsel %vm428, %v525, %v529
      %v531 = vshrl.u32 %v425, 16
      %v533 = vor.u32 %v531, %v529
      %v535 = vshrl.u32 %v426, 16
      %v537 = vshll.u32 %v426, 16
      %v539 = vrot.slane %v537, 1
      %v540 = vor.u32 %v535, %v539
      %v542 = vshll.u32 %v427, 16
      %v544 = vrot.slane %v542, 1
      %v545 = vsel %vm428, %v540, %v544
      %v546 = vshrl.u32 %v427, 16
      %v548 = vor.u32 %v546, %v544
      %549 = vrot.lane.b32.xlu0 %v440, 4
      %v550 = vpop.permute.xlu0 %549
      %551 = vrot.lane.b32.xlu0 %v443, 4
      %v552 = vpop.permute.xlu0 %551
      %553 = vrot.lane.b32.xlu0 %v455, 4
      %v554 = vpop.permute.xlu0 %553
      %555 = vrot.lane.b32.xlu0 %v458, 4
      %v556 = vpop.permute.xlu0 %555
      %557 = vrot.lane.b32.xlu0 %v470, 4
      %v558 = vpop.permute.xlu0 %557
      %559 = vrot.lane.b32.xlu0 %v473, 4
      %v560 = vpop.permute.xlu0 %559
      %561 = vrot.lane.b32.xlu0 %v485, 4
      %v562 = vpop.permute.xlu0 %561
      %563 = vrot.lane.b32.xlu0 %v488, 4
      %v564 = vpop.permute.xlu0 %563
      %565 = vrot.lane.b32.xlu0 %v500, 4
      %v566 = vpop.permute.xlu0 %565
      %567 = vrot.lane.b32.xlu0 %v503, 4
      %v568 = vpop.permute.xlu0 %567
      %569 = vrot.lane.b32.xlu0 %v515, 4
      %v570 = vpop.permute.xlu0 %569
      %571 = vrot.lane.b32.xlu0 %v518, 4
      %v572 = vpop.permute.xlu0 %571
      %573 = vrot.lane.b32.xlu0 %v530, 4
      %v574 = vpop.permute.xlu0 %573
      %575 = vrot.lane.b32.xlu0 %v533, 4
      %v576 = vpop.permute.xlu0 %575
      %577 = vrot.lane.b32.xlu0 %v545, 4
      %v578 = vpop.permute.xlu0 %577
      %579 = vrot.lane.b32.xlu0 %v548, 4
      %v580 = vpop.permute.xlu0 %579
      %vm581 = vcmask 1046528
      %v582 = vrot.slane %v412, 1
      %v583 = vrot.slane %v413, 1
      %v584 = vsel %vm581, %v582, %v583
      %v585 = vrot.slane %v414, 1
      %v586 = vrot.slane %v415, 1
      %v587 = vsel %vm581, %v585, %v586
      %v588 = vrot.slane %v416, 1
      %v589 = vrot.slane %v417, 1
      %v590 = vsel %vm581, %v588, %v589
      %v591 = vrot.slane %v418, 1
      %v592 = vrot.slane %v419, 1
      %v593 = vsel %vm581, %v591, %v592
      %v594 = vrot.slane %v420, 1
      %v595 = vrot.slane %v421, 1
      %v596 = vsel %vm581, %v594, %v595
      %v597 = vrot.slane %v422, 1
      %v598 = vrot.slane %v423, 1
      %v599 = vsel %vm581, %v597, %v598
      %v600 = vrot.slane %v424, 1
      %v601 = vrot.slane %v425, 1
      %v602 = vsel %vm581, %v600, %v601
      %v603 = vrot.slane %v426, 1
      %v604 = vrot.slane %v427, 1
      %v605 = vsel %vm581, %v603, %v604
      %606 = vrot.lane.b32.xlu0 %v584, 8
      %v607 = vpop.permute.xlu0 %606
      %608 = vrot.lane.b32.xlu0 %v583, 8
      %v609 = vpop.permute.xlu0 %608
      %610 = vrot.lane.b32.xlu0 %v587, 8
      %v611 = vpop.permute.xlu0 %610
      %612 = vrot.lane.b32.xlu0 %v586, 8
      %v613 = vpop.permute.xlu0 %612
      %614 = vrot.lane.b32.xlu0 %v590, 8
      %v615 = vpop.permute.xlu0 %614
      %616 = vrot.lane.b32.xlu0 %v589, 8
      %v617 = vpop.permute.xlu0 %616
      %618 = vrot.lane.b32.xlu0 %v593, 8
      %v619 = vpop.permute.xlu0 %618
      %620 = vrot.lane.b32.xlu0 %v592, 8
      %v621 = vpop.permute.xlu0 %620
      %622 = vrot.lane.b32.xlu0 %v596, 8
      %v623 = vpop.permute.xlu0 %622
      %624 = vrot.lane.b32.xlu0 %v595, 8
      %v625 = vpop.permute.xlu0 %624
      %626 = vrot.lane.b32.xlu0 %v599, 8
      %v627 = vpop.permute.xlu0 %626
      %628 = vrot.lane.b32.xlu0 %v598, 8
      %v629 = vpop.permute.xlu0 %628
      %630 = vrot.lane.b32.xlu0 %v602, 8
      %v631 = vpop.permute.xlu0 %630
      %632 = vrot.lane.b32.xlu0 %v601, 8
      %v633 = vpop.permute.xlu0 %632
      %634 = vrot.lane.b32.xlu0 %v605, 8
      %v635 = vpop.permute.xlu0 %634
      %636 = vrot.lane.b32.xlu0 %v604, 8
      %v637 = vpop.permute.xlu0 %636
      %v641 = vunpack.c.l.b16 %v349
      %v642 = vunpack.c.l.b16 %v350
      %v643 = vunpack.c.l.b16 %v351
      %v644 = vpack.c.b16 %v642, %v641
      %v645 = vpack.c.b16 %v643, %v643
      %646 = vrot.lane.b32.xlu0 %v414, 12
      %v647 = vpop.permute.xlu0 %646
      %648 = vrot.lane.b32.xlu0 %v415, 12
      %v649 = vpop.permute.xlu0 %648
      %650 = vrot.lane.b32.xlu0 %v416, 12
      %v651 = vpop.permute.xlu0 %650
      %652 = vrot.lane.b32.xlu0 %v417, 12
      %v653 = vpop.permute.xlu0 %652
      %654 = vrot.lane.b32.xlu0 %v418, 12
      %v655 = vpop.permute.xlu0 %654
      %656 = vrot.lane.b32.xlu0 %v419, 12
      %v657 = vpop.permute.xlu0 %656
      %658 = vrot.lane.b32.xlu0 %v420, 12
      %v659 = vpop.permute.xlu0 %658
      %660 = vrot.lane.b32.xlu0 %v421, 12
      %v661 = vpop.permute.xlu0 %660
      %662 = vrot.lane.b32.xlu0 %v422, 12
      %v663 = vpop.permute.xlu0 %662
      %664 = vrot.lane.b32.xlu0 %v423, 12
      %v665 = vpop.permute.xlu0 %664
      %666 = vrot.lane.b32.xlu0 %v424, 12
      %v667 = vpop.permute.xlu0 %666
      %668 = vrot.lane.b32.xlu0 %v425, 12
      %v669 = vpop.permute.xlu0 %668
      %670 = vrot.lane.b32.xlu0 %v426, 12
      %v671 = vpop.permute.xlu0 %670
      %672 = vrot.lane.b32.xlu0 %v427, 12
      %v673 = vpop.permute.xlu0 %672
      %674 = vrot.lane.b32.xlu0 %v644, 12
      %v675 = vpop.permute.xlu0 %674
      %676 = vrot.lane.b32.xlu0 %v645, 12
      %v677 = vpop.permute.xlu0 %676
      %v679 = vshrl.u32 %v644, 16
      %v681 = vshll.u32 %v644, 16
      %v683 = vrot.slane %v681, 1
      %v684 = vor.u32 %v679, %v683
      %v686 = vshll.u32 %v645, 16
      %v688 = vrot.slane %v686, 1
      %v689 = vsel %vm428, %v684, %v688
      %v690 = vshrl.u32 %v645, 16
      %v692 = vor.u32 %v690, %v688
      %693 = vrot.lane.b32.xlu0 %v455, 16
      %v694 = vpop.permute.xlu0 %693
      %695 = vrot.lane.b32.xlu0 %v458, 16
      %v696 = vpop.permute.xlu0 %695
      %697 = vrot.lane.b32.xlu0 %v470, 16
      %v698 = vpop.permute.xlu0 %697
      %699 = vrot.lane.b32.xlu0 %v473, 16
      %v700 = vpop.permute.xlu0 %699
      %701 = vrot.lane.b32.xlu0 %v485, 16
      %v702 = vpop.permute.xlu0 %701
      %703 = vrot.lane.b32.xlu0 %v488, 16
      %v704 = vpop.permute.xlu0 %703
      %705 = vrot.lane.b32.xlu0 %v500, 16
      %v706 = vpop.permute.xlu0 %705
      %707 = vrot.lane.b32.xlu0 %v503, 16
      %v708 = vpop.permute.xlu0 %707
      %709 = vrot.lane.b32.xlu0 %v515, 16
      %v710 = vpop.permute.xlu0 %709
      %711 = vrot.lane.b32.xlu0 %v518, 16
      %v712 = vpop.permute.xlu0 %711
      %713 = vrot.lane.b32.xlu0 %v530, 16
      %v714 = vpop.permute.xlu0 %713
      %715 = vrot.lane.b32.xlu0 %v533, 16
      %v716 = vpop.permute.xlu0 %715
      %717 = vrot.lane.b32.xlu0 %v545, 16
      %v718 = vpop.permute.xlu0 %717
      %719 = vrot.lane.b32.xlu0 %v548, 16
      %v720 = vpop.permute.xlu0 %719
      %721 = vrot.lane.b32.xlu0 %v689, 16
      %v722 = vpop.permute.xlu0 %721
      %723 = vrot.lane.b32.xlu0 %v692, 16
      %v724 = vpop.permute.xlu0 %723
      %v725 = vrot.slane %v644, 1
      %v726 = vrot.slane %v645, 1
      %v727 = vsel %vm581, %v725, %v726
      %728 = vrot.lane.b32.xlu0 %v587, 20
      %v729 = vpop.permute.xlu0 %728
      %730 = vrot.lane.b32.xlu0 %v586, 20
      %v731 = vpop.permute.xlu0 %730
      %732 = vrot.lane.b32.xlu0 %v590, 20
      %v733 = vpop.permute.xlu0 %732
      %734 = vrot.lane.b32.xlu0 %v589, 20
      %v735 = vpop.permute.xlu0 %734
      %736 = vrot.lane.b32.xlu0 %v593, 20
      %v737 = vpop.permute.xlu0 %736
      %738 = vrot.lane.b32.xlu0 %v592, 20
      %v739 = vpop.permute.xlu0 %738
      %740 = vrot.lane.b32.xlu0 %v596, 20
      %v741 = vpop.permute.xlu0 %740
      %742 = vrot.lane.b32.xlu0 %v595, 20
      %v743 = vpop.permute.xlu0 %742
      %744 = vrot.lane.b32.xlu0 %v599, 20
      %v745 = vpop.permute.xlu0 %744
      %746 = vrot.lane.b32.xlu0 %v598, 20
      %v747 = vpop.permute.xlu0 %746
      %748 = vrot.lane.b32.xlu0 %v602, 20
      %v749 = vpop.permute.xlu0 %748
      %750 = vrot.lane.b32.xlu0 %v601, 20
      %v751 = vpop.permute.xlu0 %750
      %752 = vrot.lane.b32.xlu0 %v605, 20
      %v753 = vpop.permute.xlu0 %752
      %754 = vrot.lane.b32.xlu0 %v604, 20
      %v755 = vpop.permute.xlu0 %754
      %756 = vrot.lane.b32.xlu0 %v727, 20
      %v757 = vpop.permute.xlu0 %756
      %758 = vrot.lane.b32.xlu0 %v726, 20
      %v759 = vpop.permute.xlu0 %758
      %v763 = vunpack.c.l.b16 %v352
      %v764 = vunpack.c.l.b16 %v353
      %v765 = vunpack.c.l.b16 %v354
      %v766 = vpack.c.b16 %v764, %v763
      %v767 = vpack.c.b16 %v765, %v765
      %768 = vrot.lane.b32.xlu0 %v416, 24
      %v769 = vpop.permute.xlu0 %768
      %770 = vrot.lane.b32.xlu0 %v417, 24
      %v771 = vpop.permute.xlu0 %770
      %772 = vrot.lane.b32.xlu0 %v418, 24
      %v773 = vpop.permute.xlu0 %772
      %774 = vrot.lane.b32.xlu0 %v419, 24
      %v775 = vpop.permute.xlu0 %774
      %776 = vrot.lane.b32.xlu0 %v420, 24
      %v777 = vpop.permute.xlu0 %776
      %778 = vrot.lane.b32.xlu0 %v421, 24
      %v779 = vpop.permute.xlu0 %778
      %780 = vrot.lane.b32.xlu0 %v422, 24
      %v781 = vpop.permute.xlu0 %780
      %782 = vrot.lane.b32.xlu0 %v423, 24
      %v783 = vpop.permute.xlu0 %782
      %784 = vrot.lane.b32.xlu0 %v424, 24
      %v785 = vpop.permute.xlu0 %784
      %786 = vrot.lane.b32.xlu0 %v425, 24
      %v787 = vpop.permute.xlu0 %786
      %788 = vrot.lane.b32.xlu0 %v426, 24
      %v789 = vpop.permute.xlu0 %788
      %790 = vrot.lane.b32.xlu0 %v427, 24
      %v791 = vpop.permute.xlu0 %790
      %792 = vrot.lane.b32.xlu0 %v644, 24
      %v793 = vpop.permute.xlu0 %792
      %794 = vrot.lane.b32.xlu0 %v645, 24
      %v795 = vpop.permute.xlu0 %794
      %796 = vrot.lane.b32.xlu0 %v766, 24
      %v797 = vpop.permute.xlu0 %796
      %798 = vrot.lane.b32.xlu0 %v767, 24
      %v799 = vpop.permute.xlu0 %798
      %v801 = vshrl.u32 %v766, 16
      %v803 = vshll.u32 %v766, 16
      %v805 = vrot.slane %v803, 1
      %v806 = vor.u32 %v801, %v805
      %v808 = vshll.u32 %v767, 16
      %v810 = vrot.slane %v808, 1
      %v811 = vsel %vm428, %v806, %v810
      %v812 = vshrl.u32 %v767, 16
      %v814 = vor.u32 %v812, %v810
      %815 = vrot.lane.b32.xlu0 %v470, 28
      %v816 = vpop.permute.xlu0 %815
      %817 = vrot.lane.b32.xlu0 %v473, 28
      %v818 = vpop.permute.xlu0 %817
      %819 = vrot.lane.b32.xlu0 %v485, 28
      %v820 = vpop.permute.xlu0 %819
      %821 = vrot.lane.b32.xlu0 %v488, 28
      %v822 = vpop.permute.xlu0 %821
      %823 = vrot.lane.b32.xlu0 %v500, 28
      %v824 = vpop.permute.xlu0 %823
      %825 = vrot.lane.b32.xlu0 %v503, 28
      %v826 = vpop.permute.xlu0 %825
      %827 = vrot.lane.b32.xlu0 %v515, 28
      %v828 = vpop.permute.xlu0 %827
      %829 = vrot.lane.b32.xlu0 %v518, 28
      %v830 = vpop.permute.xlu0 %829
      %831 = vrot.lane.b32.xlu0 %v530, 28
      %v832 = vpop.permute.xlu0 %831
      %833 = vrot.lane.b32.xlu0 %v533, 28
      %v834 = vpop.permute.xlu0 %833
      %835 = vrot.lane.b32.xlu0 %v545, 28
      %v836 = vpop.permute.xlu0 %835
      %837 = vrot.lane.b32.xlu0 %v548, 28
      %v838 = vpop.permute.xlu0 %837
      %839 = vrot.lane.b32.xlu0 %v689, 28
      %v840 = vpop.permute.xlu0 %839
      %841 = vrot.lane.b32.xlu0 %v692, 28
      %v842 = vpop.permute.xlu0 %841
      %843 = vrot.lane.b32.xlu0 %v811, 28
      %v844 = vpop.permute.xlu0 %843
      %845 = vrot.lane.b32.xlu0 %v814, 28
      %v846 = vpop.permute.xlu0 %845
      %v847 = vrot.slane %v766, 1
      %v848 = vrot.slane %v767, 1
      %v849 = vsel %vm581, %v847, %v848
      %850 = vrot.lane.b32.xlu0 %v590, 32
      %v851 = vpop.permute.xlu0 %850
      %852 = vrot.lane.b32.xlu0 %v589, 32
      %v853 = vpop.permute.xlu0 %852
      %854 = vrot.lane.b32.xlu0 %v593, 32
      %v855 = vpop.permute.xlu0 %854
      %856 = vrot.lane.b32.xlu0 %v592, 32
      %v857 = vpop.permute.xlu0 %856
      %858 = vrot.lane.b32.xlu0 %v596, 32
      %v859 = vpop.permute.xlu0 %858
      %860 = vrot.lane.b32.xlu0 %v595, 32
      %v861 = vpop.permute.xlu0 %860
      %862 = vrot.lane.b32.xlu0 %v599, 32
      %v863 = vpop.permute.xlu0 %862
      %864 = vrot.lane.b32.xlu0 %v598, 32
      %v865 = vpop.permute.xlu0 %864
      %866 = vrot.lane.b32.xlu0 %v602, 32
      %v867 = vpop.permute.xlu0 %866
      %868 = vrot.lane.b32.xlu0 %v601, 32
      %v869 = vpop.permute.xlu0 %868
      %870 = vrot.lane.b32.xlu0 %v605, 32
      %v871 = vpop.permute.xlu0 %870
      %872 = vrot.lane.b32.xlu0 %v604, 32
      %v873 = vpop.permute.xlu0 %872
      %874 = vrot.lane.b32.xlu0 %v727, 32
      %v875 = vpop.permute.xlu0 %874
      %876 = vrot.lane.b32.xlu0 %v726, 32
      %v877 = vpop.permute.xlu0 %876
      %878 = vrot.lane.b32.xlu0 %v849, 32
      %v879 = vpop.permute.xlu0 %878
      %880 = vrot.lane.b32.xlu0 %v848, 32
      %v881 = vpop.permute.xlu0 %880
      %v885 = vunpack.c.l.b16 %v322
      %v886 = vunpack.c.l.b16 %v323
      %v887 = vunpack.c.l.b16 %v324
      %v888 = vpack.c.b16 %v886, %v885
      %v889 = vpack.c.b16 %v887, %v887
      %vm890 = vsmask.f32 256
      %v892 = vshrl.u32 %v888, 16
      %v894 = vrot.slane %v892, 7
      %v895 = vshll.u32 %v888, 16
      %v897 = vor.u32 %v894, %v895
      %v899 = vshrl.u32 %v889, 16
      %v901 = vrot.slane %v899, 7
      %v902 = vshll.u32 %v889, 16
      %v904 = vor.u32 %v901, %v902
      %v905 = vsel %vm890, %v894, %v904
      %v906 = vrot.slane %v430, 7
      %v907 = vor.u32 %v906, %v432
      %v908 = vrot.slane %v441, 7
      %v909 = vor.u32 %v908, %v437
      %v910 = vsel %vm890, %v906, %v909
      %v911 = vrot.slane %v445, 7
      %v912 = vor.u32 %v911, %v447
      %v913 = vrot.slane %v456, 7
      %v914 = vor.u32 %v913, %v452
      %v915 = vsel %vm890, %v911, %v914
      %v916 = vrot.slane %v460, 7
      %v917 = vor.u32 %v916, %v462
      %v918 = vrot.slane %v471, 7
      %v919 = vor.u32 %v918, %v467
      %v920 = vsel %vm890, %v916, %v919
      %v921 = vrot.slane %v475, 7
      %v922 = vor.u32 %v921, %v477
      %v923 = vrot.slane %v486, 7
      %v924 = vor.u32 %v923, %v482
      %v925 = vsel %vm890, %v921, %v924
      %v926 = vrot.slane %v490, 7
      %v927 = vor.u32 %v926, %v492
      %v928 = vrot.slane %v501, 7
      %v929 = vor.u32 %v928, %v497
      %v930 = vsel %vm890, %v926, %v929
      %v931 = vrot.slane %v505, 7
      %v932 = vor.u32 %v931, %v507
      %v933 = vrot.slane %v516, 7
      %v934 = vor.u32 %v933, %v512
      %v935 = vsel %vm890, %v931, %v934
      %v936 = vrot.slane %v520, 7
      %v937 = vor.u32 %v936, %v522
      %v938 = vrot.slane %v531, 7
      %v939 = vor.u32 %v938, %v527
      %v940 = vsel %vm890, %v936, %v939
      %941 = vrot.lane.b32.xlu0 %v897, 36
      %v942 = vpop.permute.xlu0 %941
      %943 = vrot.lane.b32.xlu0 %v905, 36
      %v944 = vpop.permute.xlu0 %943
      %945 = vrot.lane.b32.xlu0 %v907, 36
      %v946 = vpop.permute.xlu0 %945
      %947 = vrot.lane.b32.xlu0 %v910, 36
      %v948 = vpop.permute.xlu0 %947
      %949 = vrot.lane.b32.xlu0 %v912, 36
      %v950 = vpop.permute.xlu0 %949
      %951 = vrot.lane.b32.xlu0 %v915, 36
      %v952 = vpop.permute.xlu0 %951
      %953 = vrot.lane.b32.xlu0 %v917, 36
      %v954 = vpop.permute.xlu0 %953
      %955 = vrot.lane.b32.xlu0 %v920, 36
      %v956 = vpop.permute.xlu0 %955
      %957 = vrot.lane.b32.xlu0 %v922, 36
      %v958 = vpop.permute.xlu0 %957
      %959 = vrot.lane.b32.xlu0 %v925, 36
      %v960 = vpop.permute.xlu0 %959
      %961 = vrot.lane.b32.xlu0 %v927, 36
      %v962 = vpop.permute.xlu0 %961
      %963 = vrot.lane.b32.xlu0 %v930, 36
      %v964 = vpop.permute.xlu0 %963
      %965 = vrot.lane.b32.xlu0 %v932, 36
      %v966 = vpop.permute.xlu0 %965
      %967 = vrot.lane.b32.xlu0 %v935, 36
      %v968 = vpop.permute.xlu0 %967
      %969 = vrot.lane.b32.xlu0 %v937, 36
      %v970 = vpop.permute.xlu0 %969
      %971 = vrot.lane.b32.xlu0 %v940, 36
      %v972 = vpop.permute.xlu0 %971
      %v973 = vrot.slane %v895, 1
      %v974 = vor.u32 %v892, %v973
      %v975 = vrot.slane %v902, 1
      %v976 = vsel %vm428, %v974, %v975
      %v977 = vor.u32 %v899, %v975
      %978 = vrot.lane.b32.xlu0 %v976, 40
      %v979 = vpop.permute.xlu0 %978
      %980 = vrot.lane.b32.xlu0 %v977, 40
      %v981 = vpop.permute.xlu0 %980
      %982 = vrot.lane.b32.xlu0 %v440, 40
      %v983 = vpop.permute.xlu0 %982
      %984 = vrot.lane.b32.xlu0 %v443, 40
      %v985 = vpop.permute.xlu0 %984
      %986 = vrot.lane.b32.xlu0 %v455, 40
      %v987 = vpop.permute.xlu0 %986
      %988 = vrot.lane.b32.xlu0 %v458, 40
      %v989 = vpop.permute.xlu0 %988
      %990 = vrot.lane.b32.xlu0 %v470, 40
      %v991 = vpop.permute.xlu0 %990
      %992 = vrot.lane.b32.xlu0 %v473, 40
      %v993 = vpop.permute.xlu0 %992
      %994 = vrot.lane.b32.xlu0 %v485, 40
      %v995 = vpop.permute.xlu0 %994
      %996 = vrot.lane.b32.xlu0 %v488, 40
      %v997 = vpop.permute.xlu0 %996
      %998 = vrot.lane.b32.xlu0 %v500, 40
      %v999 = vpop.permute.xlu0 %998
      %1000 = vrot.lane.b32.xlu0 %v503, 40
      %v1001 = vpop.permute.xlu0 %1000
      %1002 = vrot.lane.b32.xlu0 %v515, 40
      %v1003 = vpop.permute.xlu0 %1002
      %1004 = vrot.lane.b32.xlu0 %v518, 40
      %v1005 = vpop.permute.xlu0 %1004
      %1006 = vrot.lane.b32.xlu0 %v530, 40
      %v1007 = vpop.permute.xlu0 %1006
      %1008 = vrot.lane.b32.xlu0 %v533, 40
      %v1009 = vpop.permute.xlu0 %1008
      %vm1010 = vsmask.f32 6400
      %v1011 = vrot.slane %v892, 1
      %v1012 = vrot.slane %v895, 2
      %v1013 = vor.u32 %v1011, %v1012
      %v1014 = vrot.slane %v899, 1
      %v1015 = vrot.slane %v902, 2
      %v1016 = vor.u32 %v1014, %v1015
      %v1017 = vsel %vm1010, %v1013, %v1016
      %v1018 = vrot.slane %v430, 1
      %v1019 = vrot.slane %v432, 2
      %v1020 = vor.u32 %v1018, %v1019
      %v1021 = vrot.slane %v441, 1
      %v1022 = vrot.slane %v437, 2
      %v1023 = vor.u32 %v1021, %v1022
      %v1024 = vsel %vm1010, %v1020, %v1023
      %v1025 = vrot.slane %v445, 1
      %v1026 = vrot.slane %v447, 2
      %v1027 = vor.u32 %v1025, %v1026
      %v1028 = vrot.slane %v456, 1
      %v1029 = vrot.slane %v452, 2
      %v1030 = vor.u32 %v1028, %v1029
      %v1031 = vsel %vm1010, %v1027, %v1030
      %v1032 = vrot.slane %v460, 1
      %v1033 = vrot.slane %v462, 2
      %v1034 = vor.u32 %v1032, %v1033
      %v1035 = vrot.slane %v471, 1
      %v1036 = vrot.slane %v467, 2
      %v1037 = vor.u32 %v1035, %v1036
      %v1038 = vsel %vm1010, %v1034, %v1037
      %v1039 = vrot.slane %v475, 1
      %v1040 = vrot.slane %v477, 2
      %v1041 = vor.u32 %v1039, %v1040
      %v1042 = vrot.slane %v486, 1
      %v1043 = vrot.slane %v482, 2
      %v1044 = vor.u32 %v1042, %v1043
      %v1045 = vsel %vm1010, %v1041, %v1044
      %v1046 = vrot.slane %v490, 1
      %v1047 = vrot.slane %v492, 2
      %v1048 = vor.u32 %v1046, %v1047
      %v1049 = vrot.slane %v501, 1
      %v1050 = vrot.slane %v497, 2
      %v1051 = vor.u32 %v1049, %v1050
      %v1052 = vsel %vm1010, %v1048, %v1051
      %v1053 = vrot.slane %v505, 1
      %v1054 = vrot.slane %v507, 2
      %v1055 = vor.u32 %v1053, %v1054
      %v1056 = vrot.slane %v516, 1
      %v1057 = vrot.slane %v512, 2
      %v1058 = vor.u32 %v1056, %v1057
      %v1059 = vsel %vm1010, %v1055, %v1058
      %v1060 = vrot.slane %v520, 1
      %v1061 = vrot.slane %v522, 2
      %v1062 = vor.u32 %v1060, %v1061
      %v1063 = vrot.slane %v531, 1
      %v1064 = vrot.slane %v527, 2
      %v1065 = vor.u32 %v1063, %v1064
      %v1066 = vsel %vm1010, %v1062, %v1065
      %1067 = vrot.lane.b32.xlu0 %v1017, 44
      %v1068 = vpop.permute.xlu0 %1067
      %1069 = vrot.lane.b32.xlu0 %v1016, 44
      %v1070 = vpop.permute.xlu0 %1069
      %1071 = vrot.lane.b32.xlu0 %v1024, 44
      %v1072 = vpop.permute.xlu0 %1071
      %1073 = vrot.lane.b32.xlu0 %v1023, 44
      %v1074 = vpop.permute.xlu0 %1073
      %1075 = vrot.lane.b32.xlu0 %v1031, 44
      %v1076 = vpop.permute.xlu0 %1075
      %1077 = vrot.lane.b32.xlu0 %v1030, 44
      %v1078 = vpop.permute.xlu0 %1077
      %1079 = vrot.lane.b32.xlu0 %v1038, 44
      %v1080 = vpop.permute.xlu0 %1079
      %1081 = vrot.lane.b32.xlu0 %v1037, 44
      %v1082 = vpop.permute.xlu0 %1081
      %1083 = vrot.lane.b32.xlu0 %v1045, 44
      %v1084 = vpop.permute.xlu0 %1083
      %1085 = vrot.lane.b32.xlu0 %v1044, 44
      %v1086 = vpop.permute.xlu0 %1085
      %1087 = vrot.lane.b32.xlu0 %v1052, 44
      %v1088 = vpop.permute.xlu0 %1087
      %1089 = vrot.lane.b32.xlu0 %v1051, 44
      %v1090 = vpop.permute.xlu0 %1089
      %1091 = vrot.lane.b32.xlu0 %v1059, 44
      %v1092 = vpop.permute.xlu0 %1091
      %1093 = vrot.lane.b32.xlu0 %v1058, 44
      %v1094 = vpop.permute.xlu0 %1093
      %1095 = vrot.lane.b32.xlu0 %v1066, 44
      %v1096 = vpop.permute.xlu0 %1095
      %1097 = vrot.lane.b32.xlu0 %v1065, 44
      %v1098 = vpop.permute.xlu0 %1097
      %v1099 = vrot.slane %v535, 7
      %v1100 = vor.u32 %v1099, %v537
      %v1101 = vrot.slane %v546, 7
      %v1102 = vor.u32 %v1101, %v542
      %v1103 = vsel %vm890, %v1099, %v1102
      %v1104 = vrot.slane %v679, 7
      %v1105 = vor.u32 %v1104, %v681
      %v1106 = vrot.slane %v690, 7
      %v1107 = vor.u32 %v1106, %v686
      %v1108 = vsel %vm890, %v1104, %v1107
      %1109 = vrot.lane.b32.xlu0 %v912, 48
      %v1110 = vpop.permute.xlu0 %1109
      %1111 = vrot.lane.b32.xlu0 %v915, 48
      %v1112 = vpop.permute.xlu0 %1111
      %1113 = vrot.lane.b32.xlu0 %v917, 48
      %v1114 = vpop.permute.xlu0 %1113
      %1115 = vrot.lane.b32.xlu0 %v920, 48
      %v1116 = vpop.permute.xlu0 %1115
      %1117 = vrot.lane.b32.xlu0 %v922, 48
      %v1118 = vpop.permute.xlu0 %1117
      %1119 = vrot.lane.b32.xlu0 %v925, 48
      %v1120 = vpop.permute.xlu0 %1119
      %1121 = vrot.lane.b32.xlu0 %v927, 48
      %v1122 = vpop.permute.xlu0 %1121
      %1123 = vrot.lane.b32.xlu0 %v930, 48
      %v1124 = vpop.permute.xlu0 %1123
      %1125 = vrot.lane.b32.xlu0 %v932, 48
      %v1126 = vpop.permute.xlu0 %1125
      %1127 = vrot.lane.b32.xlu0 %v935, 48
      %v1128 = vpop.permute.xlu0 %1127
      %1129 = vrot.lane.b32.xlu0 %v937, 48
      %v1130 = vpop.permute.xlu0 %1129
      %1131 = vrot.lane.b32.xlu0 %v940, 48
      %v1132 = vpop.permute.xlu0 %1131
      %1133 = vrot.lane.b32.xlu0 %v1100, 48
      %v1134 = vpop.permute.xlu0 %1133
      %1135 = vrot.lane.b32.xlu0 %v1103, 48
      %v1136 = vpop.permute.xlu0 %1135
      %1137 = vrot.lane.b32.xlu0 %v1105, 48
      %v1138 = vpop.permute.xlu0 %1137
      %1139 = vrot.lane.b32.xlu0 %v1108, 48
      %v1140 = vpop.permute.xlu0 %1139
      %1141 = vrot.lane.b32.xlu0 %v455, 52
      %v1142 = vpop.permute.xlu0 %1141
      %1143 = vrot.lane.b32.xlu0 %v458, 52
      %v1144 = vpop.permute.xlu0 %1143
      %1145 = vrot.lane.b32.xlu0 %v470, 52
      %v1146 = vpop.permute.xlu0 %1145
      %1147 = vrot.lane.b32.xlu0 %v473, 52
      %v1148 = vpop.permute.xlu0 %1147
      %1149 = vrot.lane.b32.xlu0 %v485, 52
      %v1150 = vpop.permute.xlu0 %1149
      %1151 = vrot.lane.b32.xlu0 %v488, 52
      %v1152 = vpop.permute.xlu0 %1151
      %1153 = vrot.lane.b32.xlu0 %v500, 52
      %v1154 = vpop.permute.xlu0 %1153
      %1155 = vrot.lane.b32.xlu0 %v503, 52
      %v1156 = vpop.permute.xlu0 %1155
      %1157 = vrot.lane.b32.xlu0 %v515, 52
      %v1158 = vpop.permute.xlu0 %1157
      %1159 = vrot.lane.b32.xlu0 %v518, 52
      %v1160 = vpop.permute.xlu0 %1159
      %1161 = vrot.lane.b32.xlu0 %v530, 52
      %v1162 = vpop.permute.xlu0 %1161
      %1163 = vrot.lane.b32.xlu0 %v533, 52
      %v1164 = vpop.permute.xlu0 %1163
      %1165 = vrot.lane.b32.xlu0 %v545, 52
      %v1166 = vpop.permute.xlu0 %1165
      %1167 = vrot.lane.b32.xlu0 %v548, 52
      %v1168 = vpop.permute.xlu0 %1167
      %1169 = vrot.lane.b32.xlu0 %v689, 52
      %v1170 = vpop.permute.xlu0 %1169
      %1171 = vrot.lane.b32.xlu0 %v692, 52
      %v1172 = vpop.permute.xlu0 %1171
      %v1173 = vrot.slane %v535, 1
      %v1174 = vrot.slane %v537, 2
      %v1175 = vor.u32 %v1173, %v1174
      %v1176 = vrot.slane %v546, 1
      %v1177 = vrot.slane %v542, 2
      %v1178 = vor.u32 %v1176, %v1177
      %v1179 = vsel %vm1010, %v1175, %v1178
      %v1180 = vrot.slane %v679, 1
      %v1181 = vrot.slane %v681, 2
      %v1182 = vor.u32 %v1180, %v1181
      %v1183 = vrot.slane %v690, 1
      %v1184 = vrot.slane %v686, 2
      %v1185 = vor.u32 %v1183, %v1184
      %v1186 = vsel %vm1010, %v1182, %v1185
      %1187 = vrot.lane.b32.xlu0 %v1031, 56
      %v1188 = vpop.permute.xlu0 %1187
      %1189 = vrot.lane.b32.xlu0 %v1030, 56
      %v1190 = vpop.permute.xlu0 %1189
      %1191 = vrot.lane.b32.xlu0 %v1038, 56
      %v1192 = vpop.permute.xlu0 %1191
      %1193 = vrot.lane.b32.xlu0 %v1037, 56
      %v1194 = vpop.permute.xlu0 %1193
      %1195 = vrot.lane.b32.xlu0 %v1045, 56
      %v1196 = vpop.permute.xlu0 %1195
      %1197 = vrot.lane.b32.xlu0 %v1044, 56
      %v1198 = vpop.permute.xlu0 %1197
      %1199 = vrot.lane.b32.xlu0 %v1052, 56
      %v1200 = vpop.permute.xlu0 %1199
      %1201 = vrot.lane.b32.xlu0 %v1051, 56
      %v1202 = vpop.permute.xlu0 %1201
      %1203 = vrot.lane.b32.xlu0 %v1059, 56
      %v1204 = vpop.permute.xlu0 %1203
      %1205 = vrot.lane.b32.xlu0 %v1058, 56
      %v1206 = vpop.permute.xlu0 %1205
      %1207 = vrot.lane.b32.xlu0 %v1066, 56
      %v1208 = vpop.permute.xlu0 %1207
      %1209 = vrot.lane.b32.xlu0 %v1065, 56
      %v1210 = vpop.permute.xlu0 %1209
      %1211 = vrot.lane.b32.xlu0 %v1179, 56
      %v1212 = vpop.permute.xlu0 %1211
      %1213 = vrot.lane.b32.xlu0 %v1178, 56
      %v1214 = vpop.permute.xlu0 %1213
      %1215 = vrot.lane.b32.xlu0 %v1186, 56
      %v1216 = vpop.permute.xlu0 %1215
      %1217 = vrot.lane.b32.xlu0 %v1185, 56
      %v1218 = vpop.permute.xlu0 %1217
      %v1222 = vunpack.c.l.b16 %v355
      %v1223 = vunpack.c.l.b16 %v356
      %v1224 = vunpack.c.l.b16 %v357
      %v1225 = vpack.c.b16 %v1223, %v1222
      %v1226 = vpack.c.b16 %v1224, %v1224
      %v1227 = vrot.slane %v801, 7
      %v1228 = vor.u32 %v1227, %v803
      %v1229 = vrot.slane %v812, 7
      %v1230 = vor.u32 %v1229, %v808
      %v1231 = vsel %vm890, %v1227, %v1230
      %v1233 = vshrl.u32 %v1225, 16
      %v1235 = vrot.slane %v1233, 7
      %v1236 = vshll.u32 %v1225, 16
      %v1238 = vor.u32 %v1235, %v1236
      %v1240 = vshrl.u32 %v1226, 16
      %v1242 = vrot.slane %v1240, 7
      %v1243 = vshll.u32 %v1226, 16
      %v1245 = vor.u32 %v1242, %v1243
      %v1246 = vsel %vm890, %v1235, %v1245
      %1247 = vrot.lane.b32.xlu0 %v922, 60
      %v1248 = vpop.permute.xlu0 %1247
      %1249 = vrot.lane.b32.xlu0 %v925, 60
      %v1250 = vpop.permute.xlu0 %1249
      %1251 = vrot.lane.b32.xlu0 %v927, 60
      %v1252 = vpop.permute.xlu0 %1251
      %1253 = vrot.lane.b32.xlu0 %v930, 60
      %v1254 = vpop.permute.xlu0 %1253
      %1255 = vrot.lane.b32.xlu0 %v932, 60
      %v1256 = vpop.permute.xlu0 %1255
      %1257 = vrot.lane.b32.xlu0 %v935, 60
      %v1258 = vpop.permute.xlu0 %1257
      %1259 = vrot.lane.b32.xlu0 %v937, 60
      %v1260 = vpop.permute.xlu0 %1259
      %1261 = vrot.lane.b32.xlu0 %v940, 60
      %v1262 = vpop.permute.xlu0 %1261
      %1263 = vrot.lane.b32.xlu0 %v1100, 60
      %v1264 = vpop.permute.xlu0 %1263
      %1265 = vrot.lane.b32.xlu0 %v1103, 60
      %v1266 = vpop.permute.xlu0 %1265
      %1267 = vrot.lane.b32.xlu0 %v1105, 60
      %v1268 = vpop.permute.xlu0 %1267
      %1269 = vrot.lane.b32.xlu0 %v1108, 60
      %v1270 = vpop.permute.xlu0 %1269
      %1271 = vrot.lane.b32.xlu0 %v1228, 60
      %v1272 = vpop.permute.xlu0 %1271
      %1273 = vrot.lane.b32.xlu0 %v1231, 60
      %v1274 = vpop.permute.xlu0 %1273
      %1275 = vrot.lane.b32.xlu0 %v1238, 60
      %v1276 = vpop.permute.xlu0 %1275
      %1277 = vrot.lane.b32.xlu0 %v1246, 60
      %v1278 = vpop.permute.xlu0 %1277
      %vm1279 = vcmask 31744
      %v1281 = vsel %vm1279, %v412, %v550
      %v1283 = vsel %vm1279, %v413, %v552
      %v1285 = vsel %vm1279, %v414, %v554
      %v1287 = vsel %vm1279, %v415, %v556
      %v1289 = vsel %vm1279, %v416, %v558
      %v1291 = vsel %vm1279, %v417, %v560
      %v1293 = vsel %vm1279, %v418, %v562
      %v1295 = vsel %vm1279, %v419, %v564
      %v1297 = vsel %vm1279, %v420, %v566
      %v1299 = vsel %vm1279, %v421, %v568
      %v1301 = vsel %vm1279, %v422, %v570
      %v1303 = vsel %vm1279, %v423, %v572
      %v1305 = vsel %vm1279, %v424, %v574
      %v1307 = vsel %vm1279, %v425, %v576
      %v1309 = vsel %vm1279, %v426, %v578
      %v1311 = vsel %vm1279, %v427, %v580
      %vm1312 = vcmask 64512
      %v1314 = vsel %vm1312, %v1281, %v607
      %v1316 = vsel %vm1312, %v1283, %v609
      %v1318 = vsel %vm1312, %v1285, %v611
      %v1320 = vsel %vm1312, %v1287, %v613
      %v1322 = vsel %vm1312, %v1289, %v615
      %v1324 = vsel %vm1312, %v1291, %v617
      %v1326 = vsel %vm1312, %v1293, %v619
      %v1328 = vsel %vm1312, %v1295, %v621
      %v1330 = vsel %vm1312, %v1297, %v623
      %v1332 = vsel %vm1312, %v1299, %v625
      %v1334 = vsel %vm1312, %v1301, %v627
      %v1336 = vsel %vm1312, %v1303, %v629
      %v1338 = vsel %vm1312, %v1305, %v631
      %v1340 = vsel %vm1312, %v1307, %v633
      %v1342 = vsel %vm1312, %v1309, %v635
      %v1344 = vsel %vm1312, %v1311, %v637
      %vm1345 = vcmask 97280
      %v1347 = vsel %vm1345, %v1314, %v647
      %v1349 = vsel %vm1345, %v1316, %v649
      %v1351 = vsel %vm1345, %v1318, %v651
      %v1353 = vsel %vm1345, %v1320, %v653
      %v1355 = vsel %vm1345, %v1322, %v655
      %v1357 = vsel %vm1345, %v1324, %v657
      %v1359 = vsel %vm1345, %v1326, %v659
      %v1361 = vsel %vm1345, %v1328, %v661
      %v1363 = vsel %vm1345, %v1330, %v663
      %v1365 = vsel %vm1345, %v1332, %v665
      %v1367 = vsel %vm1345, %v1334, %v667
      %v1369 = vsel %vm1345, %v1336, %v669
      %v1371 = vsel %vm1345, %v1338, %v671
      %v1373 = vsel %vm1345, %v1340, %v673
      %v1375 = vsel %vm1345, %v1342, %v675
      %v1377 = vsel %vm1345, %v1344, %v677
      %vm1378 = vcmask 130048
      %v1380 = vsel %vm1378, %v1347, %v694
      %v1382 = vsel %vm1378, %v1349, %v696
      %v1384 = vsel %vm1378, %v1351, %v698
      %v1386 = vsel %vm1378, %v1353, %v700
      %v1388 = vsel %vm1378, %v1355, %v702
      %v1390 = vsel %vm1378, %v1357, %v704
      %v1392 = vsel %vm1378, %v1359, %v706
      %v1394 = vsel %vm1378, %v1361, %v708
      %v1396 = vsel %vm1378, %v1363, %v710
      %v1398 = vsel %vm1378, %v1365, %v712
      %v1400 = vsel %vm1378, %v1367, %v714
      %v1402 = vsel %vm1378, %v1369, %v716
      %v1404 = vsel %vm1378, %v1371, %v718
      %v1406 = vsel %vm1378, %v1373, %v720
      %v1408 = vsel %vm1378, %v1375, %v722
      %v1410 = vsel %vm1378, %v1377, %v724
      %vm1411 = vcmask 162816
      %v1413 = vsel %vm1411, %v1380, %v729
      %v1415 = vsel %vm1411, %v1382, %v731
      %v1417 = vsel %vm1411, %v1384, %v733
      %v1419 = vsel %vm1411, %v1386, %v735
      %v1421 = vsel %vm1411, %v1388, %v737
      %v1423 = vsel %vm1411, %v1390, %v739
      %v1425 = vsel %vm1411, %v1392, %v741
      %v1427 = vsel %vm1411, %v1394, %v743
      %v1429 = vsel %vm1411, %v1396, %v745
      %v1431 = vsel %vm1411, %v1398, %v747
      %v1433 = vsel %vm1411, %v1400, %v749
      %v1435 = vsel %vm1411, %v1402, %v751
      %v1437 = vsel %vm1411, %v1404, %v753
      %v1439 = vsel %vm1411, %v1406, %v755
      %v1441 = vsel %vm1411, %v1408, %v757
      %v1443 = vsel %vm1411, %v1410, %v759
      %vm1444 = vcmask 195584
      %v1446 = vsel %vm1444, %v1413, %v769
      %v1448 = vsel %vm1444, %v1415, %v771
      %v1450 = vsel %vm1444, %v1417, %v773
      %v1452 = vsel %vm1444, %v1419, %v775
      %v1454 = vsel %vm1444, %v1421, %v777
      %v1456 = vsel %vm1444, %v1423, %v779
      %v1458 = vsel %vm1444, %v1425, %v781
      %v1460 = vsel %vm1444, %v1427, %v783
      %v1462 = vsel %vm1444, %v1429, %v785
      %v1464 = vsel %vm1444, %v1431, %v787
      %v1466 = vsel %vm1444, %v1433, %v789
      %v1468 = vsel %vm1444, %v1435, %v791
      %v1470 = vsel %vm1444, %v1437, %v793
      %v1472 = vsel %vm1444, %v1439, %v795
      %v1474 = vsel %vm1444, %v1441, %v797
      %v1476 = vsel %vm1444, %v1443, %v799
      %vm1477 = vcmask 228352
      %v1479 = vsel %vm1477, %v1446, %v816
      %v1481 = vsel %vm1477, %v1448, %v818
      %v1483 = vsel %vm1477, %v1450, %v820
      %v1485 = vsel %vm1477, %v1452, %v822
      %v1487 = vsel %vm1477, %v1454, %v824
      %v1489 = vsel %vm1477, %v1456, %v826
      %v1491 = vsel %vm1477, %v1458, %v828
      %v1493 = vsel %vm1477, %v1460, %v830
      %v1495 = vsel %vm1477, %v1462, %v832
      %v1497 = vsel %vm1477, %v1464, %v834
      %v1499 = vsel %vm1477, %v1466, %v836
      %v1501 = vsel %vm1477, %v1468, %v838
      %v1503 = vsel %vm1477, %v1470, %v840
      %v1505 = vsel %vm1477, %v1472, %v842
      %v1507 = vsel %vm1477, %v1474, %v844
      %v1509 = vsel %vm1477, %v1476, %v846
      %vm1510 = vcmask 261120
      %v1512 = vsel %vm1510, %v1479, %v851
      %v1514 = vsel %vm1510, %v1481, %v853
      %v1516 = vsel %vm1510, %v1483, %v855
      %v1518 = vsel %vm1510, %v1485, %v857
      %v1520 = vsel %vm1510, %v1487, %v859
      %v1522 = vsel %vm1510, %v1489, %v861
      %v1524 = vsel %vm1510, %v1491, %v863
      %v1526 = vsel %vm1510, %v1493, %v865
      %v1528 = vsel %vm1510, %v1495, %v867
      %v1530 = vsel %vm1510, %v1497, %v869
      %v1532 = vsel %vm1510, %v1499, %v871
      %v1534 = vsel %vm1510, %v1501, %v873
      %v1536 = vsel %vm1510, %v1503, %v875
      %v1538 = vsel %vm1510, %v1505, %v877
      %v1540 = vsel %vm1510, %v1507, %v879
      %v1542 = vsel %vm1510, %v1509, %v881
      %vm1543 = vcmask 293888
      %v1545 = vsel %vm1543, %v1512, %v942
      %v1547 = vsel %vm1543, %v1514, %v944
      %v1549 = vsel %vm1543, %v1516, %v946
      %v1551 = vsel %vm1543, %v1518, %v948
      %v1553 = vsel %vm1543, %v1520, %v950
      %v1555 = vsel %vm1543, %v1522, %v952
      %v1557 = vsel %vm1543, %v1524, %v954
      %v1559 = vsel %vm1543, %v1526, %v956
      %v1561 = vsel %vm1543, %v1528, %v958
      %v1563 = vsel %vm1543, %v1530, %v960
      %v1565 = vsel %vm1543, %v1532, %v962
      %v1567 = vsel %vm1543, %v1534, %v964
      %v1569 = vsel %vm1543, %v1536, %v966
      %v1571 = vsel %vm1543, %v1538, %v968
      %v1573 = vsel %vm1543, %v1540, %v970
      %v1575 = vsel %vm1543, %v1542, %v972
      %vm1576 = vcmask 326656
      %v1578 = vsel %vm1576, %v1545, %v979
      %v1580 = vsel %vm1576, %v1547, %v981
      %v1582 = vsel %vm1576, %v1549, %v983
      %v1584 = vsel %vm1576, %v1551, %v985
      %v1586 = vsel %vm1576, %v1553, %v987
      %v1588 = vsel %vm1576, %v1555, %v989
      %v1590 = vsel %vm1576, %v1557, %v991
      %v1592 = vsel %vm1576, %v1559, %v993
      %v1594 = vsel %vm1576, %v1561, %v995
      %v1596 = vsel %vm1576, %v1563, %v997
      %v1598 = vsel %vm1576, %v1565, %v999
      %v1600 = vsel %vm1576, %v1567, %v1001
      %v1602 = vsel %vm1576, %v1569, %v1003
      %v1604 = vsel %vm1576, %v1571, %v1005
      %v1606 = vsel %vm1576, %v1573, %v1007
      %v1608 = vsel %vm1576, %v1575, %v1009
      %vm1609 = vcmask 359424
      %v1611 = vsel %vm1609, %v1578, %v1068
      %v1613 = vsel %vm1609, %v1580, %v1070
      %v1615 = vsel %vm1609, %v1582, %v1072
      %v1617 = vsel %vm1609, %v1584, %v1074
      %v1619 = vsel %vm1609, %v1586, %v1076
      %v1621 = vsel %vm1609, %v1588, %v1078
      %v1623 = vsel %vm1609, %v1590, %v1080
      %v1625 = vsel %vm1609, %v1592, %v1082
      %v1627 = vsel %vm1609, %v1594, %v1084
      %v1629 = vsel %vm1609, %v1596, %v1086
      %v1631 = vsel %vm1609, %v1598, %v1088
      %v1633 = vsel %vm1609, %v1600, %v1090
      %v1635 = vsel %vm1609, %v1602, %v1092
      %v1637 = vsel %vm1609, %v1604, %v1094
      %v1639 = vsel %vm1609, %v1606, %v1096
      %v1641 = vsel %vm1609, %v1608, %v1098
      %vm1642 = vcmask 392192
      %v1644 = vsel %vm1642, %v1611, %v1110
      %v1646 = vsel %vm1642, %v1613, %v1112
      %v1648 = vsel %vm1642, %v1615, %v1114
      %v1650 = vsel %vm1642, %v1617, %v1116
      %v1652 = vsel %vm1642, %v1619, %v1118
      %v1654 = vsel %vm1642, %v1621, %v1120
      %v1656 = vsel %vm1642, %v1623, %v1122
      %v1658 = vsel %vm1642, %v1625, %v1124
      %v1660 = vsel %vm1642, %v1627, %v1126
      %v1662 = vsel %vm1642, %v1629, %v1128
      %v1664 = vsel %vm1642, %v1631, %v1130
      %v1666 = vsel %vm1642, %v1633, %v1132
      %v1668 = vsel %vm1642, %v1635, %v1134
      %v1670 = vsel %vm1642, %v1637, %v1136
      %v1672 = vsel %vm1642, %v1639, %v1138
      %v1674 = vsel %vm1642, %v1641, %v1140
      %vm1675 = vcmask 424960
      %v1677 = vsel %vm1675, %v1644, %v1142
      %v1679 = vsel %vm1675, %v1646, %v1144
      %v1681 = vsel %vm1675, %v1648, %v1146
      %v1683 = vsel %vm1675, %v1650, %v1148
      %v1685 = vsel %vm1675, %v1652, %v1150
      %v1687 = vsel %vm1675, %v1654, %v1152
      %v1689 = vsel %vm1675, %v1656, %v1154
      %v1691 = vsel %vm1675, %v1658, %v1156
      %v1693 = vsel %vm1675, %v1660, %v1158
      %v1695 = vsel %vm1675, %v1662, %v1160
      %v1697 = vsel %vm1675, %v1664, %v1162
      %v1699 = vsel %vm1675, %v1666, %v1164
      %v1701 = vsel %vm1675, %v1668, %v1166
      %v1703 = vsel %vm1675, %v1670, %v1168
      %v1705 = vsel %vm1675, %v1672, %v1170
      %v1707 = vsel %vm1675, %v1674, %v1172
      %vm1708 = vcmask 457728
      %v1710 = vsel %vm1708, %v1677, %v1188
      %v1712 = vsel %vm1708, %v1679, %v1190
      %v1714 = vsel %vm1708, %v1681, %v1192
      %v1716 = vsel %vm1708, %v1683, %v1194
      %v1718 = vsel %vm1708, %v1685, %v1196
      %v1720 = vsel %vm1708, %v1687, %v1198
      %v1722 = vsel %vm1708, %v1689, %v1200
      %v1724 = vsel %vm1708, %v1691, %v1202
      %v1726 = vsel %vm1708, %v1693, %v1204
      %v1728 = vsel %vm1708, %v1695, %v1206
      %v1730 = vsel %vm1708, %v1697, %v1208
      %v1732 = vsel %vm1708, %v1699, %v1210
      %v1734 = vsel %vm1708, %v1701, %v1212
      %v1736 = vsel %vm1708, %v1703, %v1214
      %v1738 = vsel %vm1708, %v1705, %v1216
      %v1740 = vsel %vm1708, %v1707, %v1218
      %vm1741 = vcmask 490496
      %v1743 = vsel %vm1741, %v1710, %v1248
      %v1745 = vsel %vm1741, %v1712, %v1250
      %v1747 = vsel %vm1741, %v1714, %v1252
      %v1749 = vsel %vm1741, %v1716, %v1254
      %v1751 = vsel %vm1741, %v1718, %v1256
      %v1753 = vsel %vm1741, %v1720, %v1258
      %v1755 = vsel %vm1741, %v1722, %v1260
      %v1757 = vsel %vm1741, %v1724, %v1262
      %v1759 = vsel %vm1741, %v1726, %v1264
      %v1761 = vsel %vm1741, %v1728, %v1266
      %v1763 = vsel %vm1741, %v1730, %v1268
      %v1765 = vsel %vm1741, %v1732, %v1270
      %v1767 = vsel %vm1741, %v1734, %v1272
      %v1769 = vsel %vm1741, %v1736, %v1274
      %v1771 = vsel %vm1741, %v1738, %v1276
      %v1773 = vsel %vm1741, %v1740, %v1278
      %v1774 = vrot.slane %v1225, 1
      %v1775 = vrot.slane %v1226, 1
      %v1776 = vsel %vm581, %v1774, %v1775
      %1777 = vrot.lane.b32.xlu0 %v593, 4
      %v1778 = vpop.permute.xlu0 %1777
      %1779 = vrot.lane.b32.xlu0 %v592, 4
      %v1780 = vpop.permute.xlu0 %1779
      %1781 = vrot.lane.b32.xlu0 %v596, 4
      %v1782 = vpop.permute.xlu0 %1781
      %1783 = vrot.lane.b32.xlu0 %v595, 4
      %v1784 = vpop.permute.xlu0 %1783
      %1785 = vrot.lane.b32.xlu0 %v599, 4
      %v1786 = vpop.permute.xlu0 %1785
      %1787 = vrot.lane.b32.xlu0 %v598, 4
      %v1788 = vpop.permute.xlu0 %1787
      %1789 = vrot.lane.b32.xlu0 %v602, 4
      %v1790 = vpop.permute.xlu0 %1789
      %1791 = vrot.lane.b32.xlu0 %v601, 4
      %v1792 = vpop.permute.xlu0 %1791
      %1793 = vrot.lane.b32.xlu0 %v605, 4
      %v1794 = vpop.permute.xlu0 %1793
      %1795 = vrot.lane.b32.xlu0 %v604, 4
      %v1796 = vpop.permute.xlu0 %1795
      %1797 = vrot.lane.b32.xlu0 %v727, 4
      %v1798 = vpop.permute.xlu0 %1797
      %1799 = vrot.lane.b32.xlu0 %v726, 4
      %v1800 = vpop.permute.xlu0 %1799
      %1801 = vrot.lane.b32.xlu0 %v849, 4
      %v1802 = vpop.permute.xlu0 %1801
      %1803 = vrot.lane.b32.xlu0 %v848, 4
      %v1804 = vpop.permute.xlu0 %1803
      %1805 = vrot.lane.b32.xlu0 %v1776, 4
      %v1806 = vpop.permute.xlu0 %1805
      %1807 = vrot.lane.b32.xlu0 %v1775, 4
      %v1808 = vpop.permute.xlu0 %1807
      %v1813 = vunpack.c.l.b16 %v316
      %v1814 = vunpack.c.l.b16 %v317
      %v1815 = vunpack.c.l.b16 %v319
      %v1816 = vunpack.c.l.b16 %v320
      %v1817 = vpack.c.b16 %v1814, %v1813
      %v1818 = vpack.c.b16 %v1816, %v1815
      %v1819 = vrot.slane %v1817, 6
      %v1820 = vrot.slane %v1818, 6
      %v1821 = vrot.slane %v888, 6
      %v1822 = vrot.slane %v412, 6
      %v1823 = vrot.slane %v414, 6
      %v1824 = vrot.slane %v416, 6
      %v1825 = vrot.slane %v418, 6
      %v1826 = vrot.slane %v420, 6
      %1827 = vrot.lane.b32.xlu0 %v1819, 8
      %v1828 = vpop.permute.xlu0 %1827
      %1829 = vrot.lane.b32.xlu0 %v1820, 8
      %v1830 = vpop.permute.xlu0 %1829
      %1831 = vrot.lane.b32.xlu0 %v1821, 8
      %v1832 = vpop.permute.xlu0 %1831
      %1833 = vrot.lane.b32.xlu0 %v1822, 8
      %v1834 = vpop.permute.xlu0 %1833
      %1835 = vrot.lane.b32.xlu0 %v1823, 8
      %v1836 = vpop.permute.xlu0 %1835
      %1837 = vrot.lane.b32.xlu0 %v1824, 8
      %v1838 = vpop.permute.xlu0 %1837
      %1839 = vrot.lane.b32.xlu0 %v1825, 8
      %v1840 = vpop.permute.xlu0 %1839
      %1841 = vrot.lane.b32.xlu0 %v1826, 8
      %v1842 = vpop.permute.xlu0 %1841
      %v1845 = vunpack.c.l.b16 %v318
      %v1846 = vunpack.c.l.b16 %v321
      %v1847 = vpack.c.b16 %v1845, %v1845
      %v1848 = vpack.c.b16 %v1846, %v1846
      %1849 = vrot.lane.b32.xlu0 %v1817, 12
      %v1850 = vpop.permute.xlu0 %1849
      %1851 = vrot.lane.b32.xlu0 %v1847, 12
      %v1852 = vpop.permute.xlu0 %1851
      %1853 = vrot.lane.b32.xlu0 %v1818, 12
      %v1854 = vpop.permute.xlu0 %1853
      %1855 = vrot.lane.b32.xlu0 %v1848, 12
      %v1856 = vpop.permute.xlu0 %1855
      %1857 = vrot.lane.b32.xlu0 %v888, 12
      %v1858 = vpop.permute.xlu0 %1857
      %1859 = vrot.lane.b32.xlu0 %v889, 12
      %v1860 = vpop.permute.xlu0 %1859
      %1861 = vrot.lane.b32.xlu0 %v412, 12
      %v1862 = vpop.permute.xlu0 %1861
      %1863 = vrot.lane.b32.xlu0 %v413, 12
      %v1864 = vpop.permute.xlu0 %1863
      %v1865 = vpack.c.b16 %v1845, %v1814
      %v1866 = vpack.c.b16 %v1846, %v1816
      %v1867 = vpack.c.b16 %v887, %v886
      %v1868 = vpack.c.b16 %v390, %v389
      %v1869 = vpack.c.b16 %v393, %v392
      %v1870 = vpack.c.b16 %v396, %v395
      %v1871 = vpack.c.b16 %v399, %v398
      %v1872 = vpack.c.b16 %v402, %v401
      %v1873 = vrot.slane %v1865, 6
      %v1874 = vrot.slane %v1866, 6
      %v1875 = vrot.slane %v1867, 6
      %v1876 = vrot.slane %v1868, 6
      %v1877 = vrot.slane %v1869, 6
      %v1878 = vrot.slane %v1870, 6
      %v1879 = vrot.slane %v1871, 6
      %v1880 = vrot.slane %v1872, 6
      %1881 = vrot.lane.b32.xlu0 %v1873, 16
      %v1882 = vpop.permute.xlu0 %1881
      %1883 = vrot.lane.b32.xlu0 %v1874, 16
      %v1884 = vpop.permute.xlu0 %1883
      %1885 = vrot.lane.b32.xlu0 %v1875, 16
      %v1886 = vpop.permute.xlu0 %1885
      %1887 = vrot.lane.b32.xlu0 %v1876, 16
      %v1888 = vpop.permute.xlu0 %1887
      %1889 = vrot.lane.b32.xlu0 %v1877, 16
      %v1890 = vpop.permute.xlu0 %1889
      %1891 = vrot.lane.b32.xlu0 %v1878, 16
      %v1892 = vpop.permute.xlu0 %1891
      %1893 = vrot.lane.b32.xlu0 %v1879, 16
      %v1894 = vpop.permute.xlu0 %1893
      %1895 = vrot.lane.b32.xlu0 %v1880, 16
      %v1896 = vpop.permute.xlu0 %1895
      %v1897 = vrot.slane %v422, 6
      %v1898 = vrot.slane %v424, 6
      %v1899 = vrot.slane %v426, 6
      %v1900 = vrot.slane %v644, 6
      %1901 = vrot.lane.b32.xlu0 %v1823, 20
      %v1902 = vpop.permute.xlu0 %1901
      %1903 = vrot.lane.b32.xlu0 %v1824, 20
      %v1904 = vpop.permute.xlu0 %1903
      %1905 = vrot.lane.b32.xlu0 %v1825, 20
      %v1906 = vpop.permute.xlu0 %1905
      %1907 = vrot.lane.b32.xlu0 %v1826, 20
      %v1908 = vpop.permute.xlu0 %1907
      %1909 = vrot.lane.b32.xlu0 %v1897, 20
      %v1910 = vpop.permute.xlu0 %1909
      %1911 = vrot.lane.b32.xlu0 %v1898, 20
      %v1912 = vpop.permute.xlu0 %1911
      %1913 = vrot.lane.b32.xlu0 %v1899, 20
      %v1914 = vpop.permute.xlu0 %1913
      %1915 = vrot.lane.b32.xlu0 %v1900, 20
      %v1916 = vpop.permute.xlu0 %1915
      %1917 = vrot.lane.b32.xlu0 %v414, 24
      %v1918 = vpop.permute.xlu0 %1917
      %1919 = vrot.lane.b32.xlu0 %v415, 24
      %v1920 = vpop.permute.xlu0 %1919
      %v1921 = vpack.c.b16 %v405, %v404
      %v1922 = vpack.c.b16 %v408, %v407
      %v1923 = vpack.c.b16 %v411, %v410
      %v1924 = vpack.c.b16 %v643, %v642
      %v1925 = vrot.slane %v1921, 6
      %v1926 = vrot.slane %v1922, 6
      %v1927 = vrot.slane %v1923, 6
      %v1928 = vrot.slane %v1924, 6
      %1929 = vrot.lane.b32.xlu0 %v1877, 28
      %v1930 = vpop.permute.xlu0 %1929
      %1931 = vrot.lane.b32.xlu0 %v1878, 28
      %v1932 = vpop.permute.xlu0 %1931
      %1933 = vrot.lane.b32.xlu0 %v1879, 28
      %v1934 = vpop.permute.xlu0 %1933
      %1935 = vrot.lane.b32.xlu0 %v1880, 28
      %v1936 = vpop.permute.xlu0 %1935
      %1937 = vrot.lane.b32.xlu0 %v1925, 28
      %v1938 = vpop.permute.xlu0 %1937
      %1939 = vrot.lane.b32.xlu0 %v1926, 28
      %v1940 = vpop.permute.xlu0 %1939
      %1941 = vrot.lane.b32.xlu0 %v1927, 28
      %v1942 = vpop.permute.xlu0 %1941
      %1943 = vrot.lane.b32.xlu0 %v1928, 28
      %v1944 = vpop.permute.xlu0 %1943
      %v1949 = vunpack.c.l.b16 %v358
      %v1950 = vunpack.c.l.b16 %v359
      %v1951 = vunpack.c.l.b16 %v361
      %v1952 = vunpack.c.l.b16 %v362
      %v1953 = vpack.c.b16 %v1950, %v1949
      %v1954 = vpack.c.b16 %v1952, %v1951
      %v1955 = vrot.slane %v766, 6
      %v1956 = vrot.slane %v1225, 6
      %v1957 = vrot.slane %v1953, 6
      %v1958 = vrot.slane %v1954, 6
      %1959 = vrot.lane.b32.xlu0 %v1897, 32
      %v1960 = vpop.permute.xlu0 %1959
      %1961 = vrot.lane.b32.xlu0 %v1898, 32
      %v1962 = vpop.permute.xlu0 %1961
      %1963 = vrot.lane.b32.xlu0 %v1899, 32
      %v1964 = vpop.permute.xlu0 %1963
      %1965 = vrot.lane.b32.xlu0 %v1900, 32
      %v1966 = vpop.permute.xlu0 %1965
      %1967 = vrot.lane.b32.xlu0 %v1955, 32
      %v1968 = vpop.permute.xlu0 %1967
      %1969 = vrot.lane.b32.xlu0 %v1956, 32
      %v1970 = vpop.permute.xlu0 %1969
      %1971 = vrot.lane.b32.xlu0 %v1957, 32
      %v1972 = vpop.permute.xlu0 %1971
      %1973 = vrot.lane.b32.xlu0 %v1958, 32
      %v1974 = vpop.permute.xlu0 %1973
      %v1977 = vunpack.c.l.b16 %v360
      %v1978 = vunpack.c.l.b16 %v363
      %v1979 = vpack.c.b16 %v1977, %v1977
      %v1980 = vpack.c.b16 %v1978, %v1978
      %1981 = vrot.lane.b32.xlu0 %v422, 36
      %v1982 = vpop.permute.xlu0 %1981
      %1983 = vrot.lane.b32.xlu0 %v423, 36
      %v1984 = vpop.permute.xlu0 %1983
      %1985 = vrot.lane.b32.xlu0 %v424, 36
      %v1986 = vpop.permute.xlu0 %1985
      %1987 = vrot.lane.b32.xlu0 %v425, 36
      %v1988 = vpop.permute.xlu0 %1987
      %1989 = vrot.lane.b32.xlu0 %v426, 36
      %v1990 = vpop.permute.xlu0 %1989
      %1991 = vrot.lane.b32.xlu0 %v427, 36
      %v1992 = vpop.permute.xlu0 %1991
      %1993 = vrot.lane.b32.xlu0 %v644, 36
      %v1994 = vpop.permute.xlu0 %1993
      %1995 = vrot.lane.b32.xlu0 %v645, 36
      %v1996 = vpop.permute.xlu0 %1995
      %1997 = vrot.lane.b32.xlu0 %v766, 36
      %v1998 = vpop.permute.xlu0 %1997
      %1999 = vrot.lane.b32.xlu0 %v767, 36
      %v2000 = vpop.permute.xlu0 %1999
      %2001 = vrot.lane.b32.xlu0 %v1225, 36
      %v2002 = vpop.permute.xlu0 %2001
      %2003 = vrot.lane.b32.xlu0 %v1226, 36
      %v2004 = vpop.permute.xlu0 %2003
      %2005 = vrot.lane.b32.xlu0 %v1953, 36
      %v2006 = vpop.permute.xlu0 %2005
      %2007 = vrot.lane.b32.xlu0 %v1979, 36
      %v2008 = vpop.permute.xlu0 %2007
      %2009 = vrot.lane.b32.xlu0 %v1954, 36
      %v2010 = vpop.permute.xlu0 %2009
      %2011 = vrot.lane.b32.xlu0 %v1980, 36
      %v2012 = vpop.permute.xlu0 %2011
      %v2013 = vpack.c.b16 %v765, %v764
      %v2014 = vpack.c.b16 %v1224, %v1223
      %v2015 = vpack.c.b16 %v1977, %v1950
      %v2016 = vpack.c.b16 %v1978, %v1952
      %v2017 = vrot.slane %v2013, 6
      %v2018 = vrot.slane %v2014, 6
      %v2019 = vrot.slane %v2015, 6
      %v2020 = vrot.slane %v2016, 6
      %2021 = vrot.lane.b32.xlu0 %v1925, 40
      %v2022 = vpop.permute.xlu0 %2021
      %2023 = vrot.lane.b32.xlu0 %v1926, 40
      %v2024 = vpop.permute.xlu0 %2023
      %2025 = vrot.lane.b32.xlu0 %v1927, 40
      %v2026 = vpop.permute.xlu0 %2025
      %2027 = vrot.lane.b32.xlu0 %v1928, 40
      %v2028 = vpop.permute.xlu0 %2027
      %2029 = vrot.lane.b32.xlu0 %v2017, 40
      %v2030 = vpop.permute.xlu0 %2029
      %2031 = vrot.lane.b32.xlu0 %v2018, 40
      %v2032 = vpop.permute.xlu0 %2031
      %2033 = vrot.lane.b32.xlu0 %v2019, 40
      %v2034 = vpop.permute.xlu0 %2033
      %2035 = vrot.lane.b32.xlu0 %v2020, 40
      %v2036 = vpop.permute.xlu0 %2035
      %v2038 = vsel %vm1279, %v418, %v1778
      %v2040 = vsel %vm1279, %v419, %v1780
      %v2042 = vsel %vm1279, %v420, %v1782
      %v2044 = vsel %vm1279, %v421, %v1784
      %v2046 = vsel %vm1279, %v422, %v1786
      %v2048 = vsel %vm1279, %v423, %v1788
      %v2050 = vsel %vm1279, %v424, %v1790
      %v2052 = vsel %vm1279, %v425, %v1792
      %v2054 = vsel %vm1279, %v426, %v1794
      %v2056 = vsel %vm1279, %v427, %v1796
      %v2058 = vsel %vm1279, %v644, %v1798
      %v2060 = vsel %vm1279, %v645, %v1800
      %v2062 = vsel %vm1279, %v766, %v1802
      %v2064 = vsel %vm1279, %v767, %v1804
      %v2066 = vsel %vm1279, %v1225, %v1806
      %v2068 = vsel %vm1279, %v1226, %v1808
      %v2070 = vsel %vm1312, %v2038, %v1828
      %v2071 = vsel %vm1312, %v2040, %v1828
      %v2073 = vsel %vm1312, %v2042, %v1830
      %v2074 = vsel %vm1312, %v2044, %v1830
      %v2076 = vsel %vm1312, %v2046, %v1832
      %v2077 = vsel %vm1312, %v2048, %v1832
      %v2079 = vsel %vm1312, %v2050, %v1834
      %v2080 = vsel %vm1312, %v2052, %v1834
      %v2082 = vsel %vm1312, %v2054, %v1836
      %v2083 = vsel %vm1312, %v2056, %v1836
      %v2085 = vsel %vm1312, %v2058, %v1838
      %v2086 = vsel %vm1312, %v2060, %v1838
      %v2088 = vsel %vm1312, %v2062, %v1840
      %v2089 = vsel %vm1312, %v2064, %v1840
      %v2091 = vsel %vm1312, %v2066, %v1842
      %v2092 = vsel %vm1312, %v2068, %v1842
      %v2094 = vsel %vm1345, %v2070, %v1850
      %v2096 = vsel %vm1345, %v2071, %v1852
      %v2098 = vsel %vm1345, %v2073, %v1854
      %v2100 = vsel %vm1345, %v2074, %v1856
      %v2102 = vsel %vm1345, %v2076, %v1858
      %v2104 = vsel %vm1345, %v2077, %v1860
      %v2106 = vsel %vm1345, %v2079, %v1862
      %v2108 = vsel %vm1345, %v2080, %v1864
      %v2109 = vsel %vm1345, %v2082, %v647
      %v2110 = vsel %vm1345, %v2083, %v649
      %v2111 = vsel %vm1345, %v2085, %v651
      %v2112 = vsel %vm1345, %v2086, %v653
      %v2113 = vsel %vm1345, %v2088, %v655
      %v2114 = vsel %vm1345, %v2089, %v657
      %v2115 = vsel %vm1345, %v2091, %v659
      %v2116 = vsel %vm1345, %v2092, %v661
      %v2118 = vsel %vm1378, %v2094, %v1882
      %v2119 = vsel %vm1378, %v2096, %v1882
      %v2121 = vsel %vm1378, %v2098, %v1884
      %v2122 = vsel %vm1378, %v2100, %v1884
      %v2124 = vsel %vm1378, %v2102, %v1886
      %v2125 = vsel %vm1378, %v2104, %v1886
      %v2127 = vsel %vm1378, %v2106, %v1888
      %v2128 = vsel %vm1378, %v2108, %v1888
      %v2130 = vsel %vm1378, %v2109, %v1890
      %v2131 = vsel %vm1378, %v2110, %v1890
      %v2133 = vsel %vm1378, %v2111, %v1892
      %v2134 = vsel %vm1378, %v2112, %v1892
      %v2136 = vsel %vm1378, %v2113, %v1894
      %v2137 = vsel %vm1378, %v2114, %v1894
      %v2139 = vsel %vm1378, %v2115, %v1896
      %v2140 = vsel %vm1378, %v2116, %v1896
      %v2142 = vsel %vm1411, %v2118, %v1902
      %v2143 = vsel %vm1411, %v2119, %v1902
      %v2145 = vsel %vm1411, %v2121, %v1904
      %v2146 = vsel %vm1411, %v2122, %v1904
      %v2148 = vsel %vm1411, %v2124, %v1906
      %v2149 = vsel %vm1411, %v2125, %v1906
      %v2151 = vsel %vm1411, %v2127, %v1908
      %v2152 = vsel %vm1411, %v2128, %v1908
      %v2154 = vsel %vm1411, %v2130, %v1910
      %v2155 = vsel %vm1411, %v2131, %v1910
      %v2157 = vsel %vm1411, %v2133, %v1912
      %v2158 = vsel %vm1411, %v2134, %v1912
      %v2160 = vsel %vm1411, %v2136, %v1914
      %v2161 = vsel %vm1411, %v2137, %v1914
      %v2163 = vsel %vm1411, %v2139, %v1916
      %v2164 = vsel %vm1411, %v2140, %v1916
      %v2166 = vsel %vm1444, %v2142, %v1918
      %v2168 = vsel %vm1444, %v2143, %v1920
      %v2169 = vsel %vm1444, %v2145, %v769
      %v2170 = vsel %vm1444, %v2146, %v771
      %v2171 = vsel %vm1444, %v2148, %v773
      %v2172 = vsel %vm1444, %v2149, %v775
      %v2173 = vsel %vm1444, %v2151, %v777
      %v2174 = vsel %vm1444, %v2152, %v779
      %v2175 = vsel %vm1444, %v2154, %v781
      %v2176 = vsel %vm1444, %v2155, %v783
      %v2177 = vsel %vm1444, %v2157, %v785
      %v2178 = vsel %vm1444, %v2158, %v787
      %v2179 = vsel %vm1444, %v2160, %v789
      %v2180 = vsel %vm1444, %v2161, %v791
      %v2181 = vsel %vm1444, %v2163, %v793
      %v2182 = vsel %vm1444, %v2164, %v795
      %v2184 = vsel %vm1477, %v2166, %v1930
      %v2185 = vsel %vm1477, %v2168, %v1930
      %v2187 = vsel %vm1477, %v2169, %v1932
      %v2188 = vsel %vm1477, %v2170, %v1932
      %v2190 = vsel %vm1477, %v2171, %v1934
      %v2191 = vsel %vm1477, %v2172, %v1934
      %v2193 = vsel %vm1477, %v2173, %v1936
      %v2194 = vsel %vm1477, %v2174, %v1936
      %v2196 = vsel %vm1477, %v2175, %v1938
      %v2197 = vsel %vm1477, %v2176, %v1938
      %v2199 = vsel %vm1477, %v2177, %v1940
      %v2200 = vsel %vm1477, %v2178, %v1940
      %v2202 = vsel %vm1477, %v2179, %v1942
      %v2203 = vsel %vm1477, %v2180, %v1942
      %v2205 = vsel %vm1477, %v2181, %v1944
      %v2206 = vsel %vm1477, %v2182, %v1944
      %v2208 = vsel %vm1510, %v2184, %v1960
      %v2209 = vsel %vm1510, %v2185, %v1960
      %v2211 = vsel %vm1510, %v2187, %v1962
      %v2212 = vsel %vm1510, %v2188, %v1962
      %v2214 = vsel %vm1510, %v2190, %v1964
      %v2215 = vsel %vm1510, %v2191, %v1964
      %v2217 = vsel %vm1510, %v2193, %v1966
      %v2218 = vsel %vm1510, %v2194, %v1966
      %v2220 = vsel %vm1510, %v2196, %v1968
      %v2221 = vsel %vm1510, %v2197, %v1968
      %v2223 = vsel %vm1510, %v2199, %v1970
      %v2224 = vsel %vm1510, %v2200, %v1970
      %v2226 = vsel %vm1510, %v2202, %v1972
      %v2227 = vsel %vm1510, %v2203, %v1972
      %v2229 = vsel %vm1510, %v2205, %v1974
      %v2230 = vsel %vm1510, %v2206, %v1974
      %v2232 = vsel %vm1543, %v2208, %v1982
      %v2234 = vsel %vm1543, %v2209, %v1984
      %v2236 = vsel %vm1543, %v2211, %v1986
      %v2238 = vsel %vm1543, %v2212, %v1988
      %v2240 = vsel %vm1543, %v2214, %v1990
      %v2242 = vsel %vm1543, %v2215, %v1992
      %v2244 = vsel %vm1543, %v2217, %v1994
      %v2246 = vsel %vm1543, %v2218, %v1996
      %v2248 = vsel %vm1543, %v2220, %v1998
      %v2250 = vsel %vm1543, %v2221, %v2000
      %v2252 = vsel %vm1543, %v2223, %v2002
      %v2254 = vsel %vm1543, %v2224, %v2004
      %v2256 = vsel %vm1543, %v2226, %v2006
      %v2258 = vsel %vm1543, %v2227, %v2008
      %v2260 = vsel %vm1543, %v2229, %v2010
      %v2262 = vsel %vm1543, %v2230, %v2012
      %v2264 = vsel %vm1576, %v2232, %v2022
      %v2265 = vsel %vm1576, %v2234, %v2022
      %v2267 = vsel %vm1576, %v2236, %v2024
      %v2268 = vsel %vm1576, %v2238, %v2024
      %v2270 = vsel %vm1576, %v2240, %v2026
      %v2271 = vsel %vm1576, %v2242, %v2026
      %v2273 = vsel %vm1576, %v2244, %v2028
      %v2274 = vsel %vm1576, %v2246, %v2028
      %v2276 = vsel %vm1576, %v2248, %v2030
      %v2277 = vsel %vm1576, %v2250, %v2030
      %v2279 = vsel %vm1576, %v2252, %v2032
      %v2280 = vsel %vm1576, %v2254, %v2032
      %v2282 = vsel %vm1576, %v2256, %v2034
      %v2283 = vsel %vm1576, %v2258, %v2034
      %v2285 = vsel %vm1576, %v2260, %v2036
      %v2286 = vsel %vm1576, %v2262, %v2036
      %v2287 = vshrl.u32 %v2264, 16
      %v2289 = vshll.u32 %v2264, 16
      %v2291 = vrot.slane %v2289, 1
      %v2292 = vor.u32 %v2287, %v2291
      %v2293 = vshll.u32 %v2265, 16
      %v2295 = vrot.slane %v2293, 1
      %v2296 = vsel %vm428, %v2292, %v2295
      %v2297 = vshrl.u32 %v2265, 16
      %v2299 = vor.u32 %v2297, %v2295
      %v2300 = vshrl.u32 %v2267, 16
      %v2302 = vshll.u32 %v2267, 16
      %v2304 = vrot.slane %v2302, 1
      %v2305 = vor.u32 %v2300, %v2304
      %v2306 = vshll.u32 %v2268, 16
      %v2308 = vrot.slane %v2306, 1
      %v2309 = vsel %vm428, %v2305, %v2308
      %v2310 = vshrl.u32 %v2268, 16
      %v2312 = vor.u32 %v2310, %v2308
      %v2313 = vshrl.u32 %v2270, 16
      %v2315 = vshll.u32 %v2270, 16
      %v2317 = vrot.slane %v2315, 1
      %v2318 = vor.u32 %v2313, %v2317
      %v2319 = vshll.u32 %v2271, 16
      %v2321 = vrot.slane %v2319, 1
      %v2322 = vsel %vm428, %v2318, %v2321
      %v2323 = vshrl.u32 %v2271, 16
      %v2325 = vor.u32 %v2323, %v2321
      %v2326 = vshrl.u32 %v2273, 16
      %v2328 = vshll.u32 %v2273, 16
      %v2330 = vrot.slane %v2328, 1
      %v2331 = vor.u32 %v2326, %v2330
      %v2332 = vshll.u32 %v2274, 16
      %v2334 = vrot.slane %v2332, 1
      %v2335 = vsel %vm428, %v2331, %v2334
      %v2336 = vshrl.u32 %v2274, 16
      %v2338 = vor.u32 %v2336, %v2334
      %v2339 = vshrl.u32 %v2276, 16
      %v2341 = vshll.u32 %v2276, 16
      %v2343 = vrot.slane %v2341, 1
      %v2344 = vor.u32 %v2339, %v2343
      %v2345 = vshll.u32 %v2277, 16
      %v2347 = vrot.slane %v2345, 1
      %v2348 = vsel %vm428, %v2344, %v2347
      %v2349 = vshrl.u32 %v2277, 16
      %v2351 = vor.u32 %v2349, %v2347
      %v2352 = vshrl.u32 %v2279, 16
      %v2354 = vshll.u32 %v2279, 16
      %v2356 = vrot.slane %v2354, 1
      %v2357 = vor.u32 %v2352, %v2356
      %v2358 = vshll.u32 %v2280, 16
      %v2360 = vrot.slane %v2358, 1
      %v2361 = vsel %vm428, %v2357, %v2360
      %v2362 = vshrl.u32 %v2280, 16
      %v2364 = vor.u32 %v2362, %v2360
      %v2365 = vshrl.u32 %v2282, 16
      %v2367 = vshll.u32 %v2282, 16
      %v2369 = vrot.slane %v2367, 1
      %v2370 = vor.u32 %v2365, %v2369
      %v2371 = vshll.u32 %v2283, 16
      %v2373 = vrot.slane %v2371, 1
      %v2374 = vsel %vm428, %v2370, %v2373
      %v2375 = vshrl.u32 %v2283, 16
      %v2377 = vor.u32 %v2375, %v2373
      %v2378 = vshrl.u32 %v2285, 16
      %v2380 = vshll.u32 %v2285, 16
      %v2382 = vrot.slane %v2380, 1
      %v2383 = vor.u32 %v2378, %v2382
      %v2384 = vshll.u32 %v2286, 16
      %v2386 = vrot.slane %v2384, 1
      %v2387 = vsel %vm428, %v2383, %v2386
      %v2388 = vshrl.u32 %v2286, 16
      %v2390 = vor.u32 %v2388, %v2386
      %2391 = vrot.lane.b32.xlu0 %v2296, 64
      %v2392 = vpop.permute.xlu0 %2391
      %2393 = vrot.lane.b32.xlu0 %v2299, 64
      %v2394 = vpop.permute.xlu0 %2393
      %2395 = vrot.lane.b32.xlu0 %v2309, 64
      %v2396 = vpop.permute.xlu0 %2395
      %2397 = vrot.lane.b32.xlu0 %v2312, 64
      %v2398 = vpop.permute.xlu0 %2397
      %2399 = vrot.lane.b32.xlu0 %v2322, 64
      %v2400 = vpop.permute.xlu0 %2399
      %2401 = vrot.lane.b32.xlu0 %v2325, 64
      %v2402 = vpop.permute.xlu0 %2401
      %2403 = vrot.lane.b32.xlu0 %v2335, 64
      %v2404 = vpop.permute.xlu0 %2403
      %2405 = vrot.lane.b32.xlu0 %v2338, 64
      %v2406 = vpop.permute.xlu0 %2405
      %2407 = vrot.lane.b32.xlu0 %v2348, 64
      %v2408 = vpop.permute.xlu0 %2407
      %2409 = vrot.lane.b32.xlu0 %v2351, 64
      %v2410 = vpop.permute.xlu0 %2409
      %2411 = vrot.lane.b32.xlu0 %v2361, 64
      %v2412 = vpop.permute.xlu0 %2411
      %2413 = vrot.lane.b32.xlu0 %v2364, 64
      %v2414 = vpop.permute.xlu0 %2413
      %2415 = vrot.lane.b32.xlu0 %v2374, 64
      %v2416 = vpop.permute.xlu0 %2415
      %2417 = vrot.lane.b32.xlu0 %v2377, 64
      %v2418 = vpop.permute.xlu0 %2417
      %2419 = vrot.lane.b32.xlu0 %v2387, 64
      %v2420 = vpop.permute.xlu0 %2419
      %2421 = vrot.lane.b32.xlu0 %v2390, 64
      %v2422 = vpop.permute.xlu0 %2421
      %vm2423 = vcmask 523264
      %v2425 = vsel %vm2423, %v1743, %v2392
      %v2427 = vsel %vm2423, %v1745, %v2394
      %v2429 = vsel %vm2423, %v1747, %v2396
      %v2431 = vsel %vm2423, %v1749, %v2398
      %v2433 = vsel %vm2423, %v1751, %v2400
      %v2435 = vsel %vm2423, %v1753, %v2402
      %v2437 = vsel %vm2423, %v1755, %v2404
      %v2439 = vsel %vm2423, %v1757, %v2406
      %v2441 = vsel %vm2423, %v1759, %v2408
      %v2443 = vsel %vm2423, %v1761, %v2410
      %v2445 = vsel %vm2423, %v1763, %v2412
      %v2447 = vsel %vm2423, %v1765, %v2414
      %v2449 = vsel %vm2423, %v1767, %v2416
      %v2451 = vsel %vm2423, %v1769, %v2418
      %v2453 = vsel %vm2423, %v1771, %v2420
      %v2455 = vsel %vm2423, %v1773, %v2422
      %v2456 = vshrl.u32 %v2425, 16
      %v2458 = vrot.slane %v2456, 1
      %v2459 = vshll.u32 %v2425, 16
      %v2461 = vrot.slane %v2459, 2
      %v2462 = vor.u32 %v2458, %v2461
      %v2463 = vshrl.u32 %v2427, 16
      %v2465 = vrot.slane %v2463, 1
      %v2466 = vshll.u32 %v2427, 16
      %v2468 = vrot.slane %v2466, 2
      %v2469 = vor.u32 %v2465, %v2468
      %v2470 = vsel %vm1010, %v2462, %v2469
      %v2471 = vshrl.u32 %v2429, 16
      %v2473 = vrot.slane %v2471, 1
      %v2474 = vshll.u32 %v2429, 16
      %v2476 = vrot.slane %v2474, 2
      %v2477 = vor.u32 %v2473, %v2476
      %v2478 = vshrl.u32 %v2431, 16
      %v2480 = vrot.slane %v2478, 1
      %v2481 = vshll.u32 %v2431, 16
      %v2483 = vrot.slane %v2481, 2
      %v2484 = vor.u32 %v2480, %v2483
      %v2485 = vsel %vm1010, %v2477, %v2484
      %v2486 = vshrl.u32 %v2433, 16
      %v2488 = vrot.slane %v2486, 1
      %v2489 = vshll.u32 %v2433, 16
      %v2491 = vrot.slane %v2489, 2
      %v2492 = vor.u32 %v2488, %v2491
      %v2493 = vshrl.u32 %v2435, 16
      %v2495 = vrot.slane %v2493, 1
      %v2496 = vshll.u32 %v2435, 16
      %v2498 = vrot.slane %v2496, 2
      %v2499 = vor.u32 %v2495, %v2498
      %v2500 = vsel %vm1010, %v2492, %v2499
      %v2501 = vshrl.u32 %v2437, 16
      %v2503 = vrot.slane %v2501, 1
      %v2504 = vshll.u32 %v2437, 16
      %v2506 = vrot.slane %v2504, 2
      %v2507 = vor.u32 %v2503, %v2506
      %v2508 = vshrl.u32 %v2439, 16
      %v2510 = vrot.slane %v2508, 1
      %v2511 = vshll.u32 %v2439, 16
      %v2513 = vrot.slane %v2511, 2
      %v2514 = vor.u32 %v2510, %v2513
      %v2515 = vsel %vm1010, %v2507, %v2514
      %v2516 = vshrl.u32 %v2441, 16
      %v2518 = vrot.slane %v2516, 1
      %v2519 = vshll.u32 %v2441, 16
      %v2521 = vrot.slane %v2519, 2
      %v2522 = vor.u32 %v2518, %v2521
      %v2523 = vshrl.u32 %v2443, 16
      %v2525 = vrot.slane %v2523, 1
      %v2526 = vshll.u32 %v2443, 16
      %v2528 = vrot.slane %v2526, 2
      %v2529 = vor.u32 %v2525, %v2528
      %v2530 = vsel %vm1010, %v2522, %v2529
      %v2531 = vshrl.u32 %v2445, 16
      %v2533 = vrot.slane %v2531, 1
      %v2534 = vshll.u32 %v2445, 16
      %v2536 = vrot.slane %v2534, 2
      %v2537 = vor.u32 %v2533, %v2536
      %v2538 = vshrl.u32 %v2447, 16
      %v2540 = vrot.slane %v2538, 1
      %v2541 = vshll.u32 %v2447, 16
      %v2543 = vrot.slane %v2541, 2
      %v2544 = vor.u32 %v2540, %v2543
      %v2545 = vsel %vm1010, %v2537, %v2544
      %v2546 = vshrl.u32 %v2449, 16
      %v2548 = vrot.slane %v2546, 1
      %v2549 = vshll.u32 %v2449, 16
      %v2551 = vrot.slane %v2549, 2
      %v2552 = vor.u32 %v2548, %v2551
      %v2553 = vshrl.u32 %v2451, 16
      %v2555 = vrot.slane %v2553, 1
      %v2556 = vshll.u32 %v2451, 16
      %v2558 = vrot.slane %v2556, 2
      %v2559 = vor.u32 %v2555, %v2558
      %v2560 = vsel %vm1010, %v2552, %v2559
      %v2561 = vshrl.u32 %v2453, 16
      %v2563 = vrot.slane %v2561, 1
      %v2564 = vshll.u32 %v2453, 16
      %v2566 = vrot.slane %v2564, 2
      %v2567 = vor.u32 %v2563, %v2566
      %v2568 = vshrl.u32 %v2455, 16
      %v2570 = vrot.slane %v2568, 1
      %v2571 = vshll.u32 %v2455, 16
      %v2573 = vrot.slane %v2571, 2
      %v2574 = vor.u32 %v2570, %v2573
      %v2575 = vsel %vm1010, %v2567, %v2574
      %v2576 = vld [vmem:[%s2] sm:$0xf]
      %v2577 = vld [vmem:[%s2 + $0x4] sm:$0xf]
      %v2578 = vld [vmem:[%s2 + $0x8] sm:$0xf]
      %v2579 = vld [vmem:[%s2 + $0xc] sm:$0xf]
      %v2580 = vld [vmem:[%s2 + $0x10] sm:$0xf]
      %v2581 = vld [vmem:[%s2 + $0x14] sm:$0xf]
      %v2582 = vld [vmem:[%s2 + $0x18] sm:$0xf]
      %v2583 = vld [vmem:[%s2 + $0x1c] sm:$0xf]
      %v2584 = vld [vmem:[%s2 + $0x20] sm:$0xf]
      %v2585 = vld [vmem:[%s2 + $0x24] sm:$0xf]
      %v2586 = vld [vmem:[%s2 + $0x28] sm:$0xf]
      %v2587 = vld [vmem:[%s2 + $0x2c] sm:$0xf]
      %v2588 = vld [vmem:[%s2 + $0x30] sm:$0xf]
      %v2589 = vld [vmem:[%s2 + $0x34] sm:$0x3]
      %v2604 = vunpack.c.l.b16 %v2576
      %v2605 = vunpack.c.l.b16 %v2577
      %v2606 = vunpack.c.l.b16 %v2578
      %v2607 = vunpack.c.l.b16 %v2579
      %v2608 = vunpack.c.l.b16 %v2580
      %v2609 = vunpack.c.l.b16 %v2581
      %v2610 = vunpack.c.l.b16 %v2582
      %v2611 = vunpack.c.l.b16 %v2583
      %v2612 = vunpack.c.l.b16 %v2584
      %v2613 = vunpack.c.l.b16 %v2585
      %v2614 = vunpack.c.l.b16 %v2586
      %v2615 = vunpack.c.l.b16 %v2587
      %v2616 = vunpack.c.l.b16 %v2588
      %v2617 = vunpack.c.l.b16 %v2589
      %v2618 = vpack.c.b16 %v2605, %v2604
      %v2619 = vpack.c.b16 %v2607, %v2606
      %v2620 = vpack.c.b16 %v2609, %v2608
      %v2621 = vpack.c.b16 %v2611, %v2610
      %v2622 = vpack.c.b16 %v2613, %v2612
      %v2623 = vpack.c.b16 %v2615, %v2614
      %v2624 = vpack.c.b16 %v2617, %v2616
      %vm2631 = vcmask 883712
      %v2633 = vsel %vm2631, %v2470, 0
      %v2636 = vsel %vm2631, %v2485, 0
      %v2639 = vsel %vm2631, %v2500, 0
      %v2642 = vsel %vm2631, %v2515, 0
      %v2645 = vsel %vm2631, %v2530, 0
      %v2648 = vsel %vm2631, %v2545, 0
      %v2651 = vsel %vm2631, %v2560, 0
      %v2654 = vsel %vm2631, %v2575, 0
      %vm2656 = vcmask 1045504
      %v2658 = vsel %vm2656, %v2624, 0
      %2660 = vmatprep.subr.bf16.mxu0 0
      %2661 = vmatpush1.bf16.msra.mxu0 %v2618
      %2662 = vmatprep.subr.bf16.mxu0 0
      %2663 = vmatpush1.bf16.msra.mxu0 %v2619
      %2664 = vmatprep.subr.bf16.mxu0 0
      %2665 = vmatpush1.bf16.msra.mxu0 %v2620
      %2666 = vmatprep.subr.bf16.mxu0 0
      %2667 = vmatpush1.bf16.msra.mxu0 %v2621
      %2668 = vmatprep.subr.bf16.mxu0 0
      %2669 = vmatpush1.bf16.msra.mxu0 %v2622
      %2670 = vmatprep.subr.bf16.mxu0 0
      %2671 = vmatpush1.bf16.msra.mxu0 %v2623
      %2672 = vmatprep.subr.bf16.mxu0 0
      %2673 = vmatpush1.bf16.msra.mxu0 %v2658
      %2674 = vmatprep.subr.bf16.mxu0 0
      %2675 = vmatpush1.bf16.msra.mxu0 0
      %2676 = vmatprep.subr.bf16.mxu0 0
      %2677 = vmatpush1.bf16.msra.mxu0 0
      %2678 = vmatprep.subr.bf16.mxu0 0
      %2679 = vmatpush1.bf16.msra.mxu0 0
      %2680 = vmatprep.subr.bf16.mxu0 0
      %2681 = vmatpush1.bf16.msra.mxu0 0
      %2682 = vmatprep.subr.bf16.mxu0 0
      %2683 = vmatpush1.bf16.msra.mxu0 0
      %2684 = vmatprep.subr.bf16.mxu0 0
      %2685 = vmatpush1.bf16.msra.mxu0 0
      %2686 = vmatprep.subr.bf16.mxu0 0
      %2687 = vmatpush1.bf16.msra.mxu0 0
      %2688 = vmatprep.subr.bf16.mxu0 0
      %2689 = vmatpush1.bf16.msra.mxu0 0
      %2690 = vmatprep.subr.bf16.mxu0 0
      %2691 = vmatpush1.bf16.msra.mxu0 0
      %2692 = vmatprep.mubr.bf16.mxu0 0
      %2693 = vmatmul.mubr.bf16.gmra.mrb[0].mxu0 %v2633
      %v2694 = vpop.f32.mrb[0].mxu0
      %v2695 = vadd.f32 0.0, %v2694
      %v2696 = vpop.f32.mrb[0].mxu0
      %v2697 = vpop.f32.mrb[0].mxu0
      %v2698 = vadd.f32 0.0, %v2697
      %v2699 = vpop.f32.mrb[0].mxu0
      %2700 = vmatprep.mubr.bf16.mxu0 0
      %2701 = vmatmul.mubr.bf16.gmra.mrb[0].mxu0 %v2636
      %v2702 = vpop.f32.mrb[0].mxu0
      %v2703 = vadd.f32 0.0, %v2702
      %v2704 = vpop.f32.mrb[0].mxu0
      %v2705 = vpop.f32.mrb[0].mxu0
      %v2706 = vadd.f32 0.0, %v2705
      %v2707 = vpop.f32.mrb[0].mxu0
      %2708 = vmatprep.mubr.bf16.mxu0 0
      %2709 = vmatmul.mubr.bf16.gmra.mrb[0].mxu0 %v2639
      %v2710 = vpop.f32.mrb[0].mxu0
      %v2711 = vadd.f32 0.0, %v2710
      %v2712 = vpop.f32.mrb[0].mxu0
      %v2713 = vpop.f32.mrb[0].mxu0
      %v2714 = vadd.f32 0.0, %v2713
      %v2715 = vpop.f32.mrb[0].mxu0
      %2716 = vmatprep.mubr.bf16.mxu0 0
      %2717 = vmatmul.mubr.bf16.gmra.mrb[0].mxu0 %v2642
      %v2718 = vpop.f32.mrb[0].mxu0
      %v2719 = vadd.f32 0.0, %v2718
      %v2720 = vpop.f32.mrb[0].mxu0
      %v2721 = vpop.f32.mrb[0].mxu0
      %v2722 = vadd.f32 0.0, %v2721
      %v2723 = vpop.f32.mrb[0].mxu0
      %2724 = vmatprep.mubr.bf16.mxu0 0
      %2725 = vmatmul.mubr.bf16.gmra.mrb[0].mxu0 %v2645
      %v2726 = vpop.f32.mrb[0].mxu0
      %v2727 = vadd.f32 0.0, %v2726
      %v2728 = vpop.f32.mrb[0].mxu0
      %v2729 = vpop.f32.mrb[0].mxu0
      %v2730 = vadd.f32 0.0, %v2729
      %v2731 = vpop.f32.mrb[0].mxu0
      %2732 = vmatprep.mubr.bf16.mxu0 0
      %2733 = vmatmul.mubr.bf16.gmra.mrb[0].mxu0 %v2648
      %v2734 = vpop.f32.mrb[0].mxu0
      %v2735 = vadd.f32 0.0, %v2734
      %v2736 = vpop.f32.mrb[0].mxu0
      %v2737 = vpop.f32.mrb[0].mxu0
      %v2738 = vadd.f32 0.0, %v2737
      %v2739 = vpop.f32.mrb[0].mxu0
      %2740 = vmatprep.mubr.bf16.mxu0 0
      %2741 = vmatmul.mubr.bf16.gmra.mrb[0].mxu0 %v2651
      %v2742 = vpop.f32.mrb[0].mxu0
      %v2743 = vadd.f32 0.0, %v2742
      %v2744 = vpop.f32.mrb[0].mxu0
      %v2745 = vpop.f32.mrb[0].mxu0
      %v2746 = vadd.f32 0.0, %v2745
      %v2747 = vpop.f32.mrb[0].mxu0
      %2748 = vmatprep.mubr.bf16.mxu0 0
      %2749 = vmatmul.mubr.bf16.gmra.mrb[0].mxu0 %v2654
      %v2750 = vpop.f32.mrb[0].mxu0
      %v2751 = vadd.f32 0.0, %v2750
      %v2752 = vpop.f32.mrb[0].mxu0
      %v2753 = vpop.f32.mrb[0].mxu0
      %v2754 = vadd.f32 0.0, %v2753
      %v2755 = vpop.f32.mrb[0].mxu0
      %2756 = vdwg.mxu0
      %v2757 = vld [vmem:[%s3] sm:$0x1]
      %v2759 = vlaneseq
      %v2760 = vshrl.u32 %v2759, 7
      %v2761 = vsub.s32 0, %v2760
      %v2762 = vrot.slane %v2757, %v2761
      %v2764 = vmul.f32 %v2695, %v2762
      %v2765 = vmul.f32 %v2698, %v2762
      %v2766 = vmul.f32 %v2703, %v2762
      %v2767 = vmul.f32 %v2706, %v2762
      %v2768 = vmul.f32 %v2711, %v2762
      %v2769 = vmul.f32 %v2714, %v2762
      %v2770 = vmul.f32 %v2719, %v2762
      %v2771 = vmul.f32 %v2722, %v2762
      %v2772 = vmul.f32 %v2727, %v2762
      %v2773 = vmul.f32 %v2730, %v2762
      %v2774 = vmul.f32 %v2735, %v2762
      %v2775 = vmul.f32 %v2738, %v2762
      %v2776 = vmul.f32 %v2743, %v2762
      %v2777 = vmul.f32 %v2746, %v2762
      %v2778 = vmul.f32 %v2751, %v2762
      %v2779 = vmul.f32 %v2754, %v2762
      %v2780 = vld [vmem:[%s4] sm:$0x1]
      %v2782 = vlaneseq
      %v2783 = vshrl.u32 %v2782, 7
      %v2784 = vsub.s32 0, %v2783
      %v2785 = vrot.slane %v2780, %v2784
      %v2787 = vadd.f32 %v2764, %v2785
      %v2788 = vadd.f32 %v2765, %v2785
      %v2789 = vadd.f32 %v2766, %v2785
      %v2790 = vadd.f32 %v2767, %v2785
      %v2791 = vadd.f32 %v2768, %v2785
      %v2792 = vadd.f32 %v2769, %v2785
      %v2793 = vadd.f32 %v2770, %v2785
      %v2794 = vadd.f32 %v2771, %v2785
      %v2795 = vadd.f32 %v2772, %v2785
      %v2796 = vadd.f32 %v2773, %v2785
      %v2797 = vadd.f32 %v2774, %v2785
      %v2798 = vadd.f32 %v2775, %v2785
      %v2799 = vadd.f32 %v2776, %v2785
      %v2800 = vadd.f32 %v2777, %v2785
      %v2801 = vadd.f32 %v2778, %v2785
      %v2802 = vadd.f32 %v2779, %v2785
      %v2803 = vmax.f32 %v2787, 0.0
      %v2804 = vmax.f32 %v2788, 0.0
      %v2805 = vmax.f32 %v2789, 0.0
      %v2806 = vmax.f32 %v2790, 0.0
      %v2807 = vmax.f32 %v2791, 0.0
      %v2808 = vmax.f32 %v2792, 0.0
      %v2809 = vmax.f32 %v2793, 0.0
      %v2810 = vmax.f32 %v2794, 0.0
      %v2811 = vmax.f32 %v2795, 0.0
      %v2812 = vmax.f32 %v2796, 0.0
      %v2813 = vmax.f32 %v2797, 0.0
      %v2814 = vmax.f32 %v2798, 0.0
      %v2815 = vmax.f32 %v2799, 0.0
      %v2816 = vmax.f32 %v2800, 0.0
      %v2817 = vmax.f32 %v2801, 0.0
      %v2818 = vmax.f32 %v2802, 0.0
      %vm2819 = vcmask 48128
      %2820 = vst.msk [vmem:[%s313] sm:$0xff] %vm2819, %v2803
      %2821 = vst.msk [vmem:[%s313 + $0x8] sm:$0xff] %vm2819, %v2804
      %2822 = vst.msk [vmem:[%s313 + $0x10] sm:$0xff] %vm2819, %v2805
      %2823 = vst.msk [vmem:[%s313 + $0x18] sm:$0xff] %vm2819, %v2806
      %2824 = vst.msk [vmem:[%s313 + $0x20] sm:$0xff] %vm2819, %v2807
      %2825 = vst.msk [vmem:[%s313 + $0x28] sm:$0xff] %vm2819, %v2808
      %2826 = vst.msk [vmem:[%s313 + $0x30] sm:$0xff] %vm2819, %v2809
      %2827 = vst.msk [vmem:[%s313 + $0x38] sm:$0xff] %vm2819, %v2810
      %2828 = vst.msk [vmem:[%s313 + $0x40] sm:$0xff] %vm2819, %v2811
      %2829 = vst.msk [vmem:[%s313 + $0x48] sm:$0xff] %vm2819, %v2812
      %2830 = vst.msk [vmem:[%s313 + $0x50] sm:$0xff] %vm2819, %v2813
      %2831 = vst.msk [vmem:[%s313 + $0x58] sm:$0xff] %vm2819, %v2814
      %2832 = vst.msk [vmem:[%s313 + $0x60] sm:$0xff] %vm2819, %v2815
      %2833 = vst.msk [vmem:[%s313 + $0x68] sm:$0xff] %vm2819, %v2816
      %2834 = vst.msk [vmem:[%s313 + $0x70] sm:$0xff] %vm2819, %v2817
      %2835 = vst.msk [vmem:[%s313 + $0x78] sm:$0xff] %vm2819, %v2818
      %s2836 = smul.u32 8, %s21
      %p2837 = scmp.lt.s32.totalorder %s20, 1
      %s2838 = scalar_select %p2837, %s20, 1
      %p2839 = scmp.lt.s32.totalorder %s2836, 15
      %s2840 = scalar_select %p2839, %s2836, 15
      %s2841 = smul.addr %s2840, 2
      %s2842 = smul.addr %s2838, 32
      %s2843 = sadd.s32 %s2841, %s2842
      %s2844 = smul.addr %s2843, 8
      %s2845 = scalar_lea.vmem %s5, %s2844
      // Predicated region
      $region41: #{tpu_custom_call.1} parent=39 // pred_check
        %p2846 = pneg %p169
      $region42: #{tpu_custom_call.1} parent=39 // pred_check_branch
        %2848 = sbr.rel (%p2846) target = $region44
      $region43: #{tpu_custom_call.1} parent=39 // pred_region
        %s2849 = smul.u32 8, %s21
      $region44: #{tpu_custom_call.1} parent=39 // pred_fallthru
        _
    $region40: #{tpu_custom_call.1} parent=5 // pred_fallthru
      _
    %p2850 = scmp.le.s32.totalorder 2, %s11
    // Predicated region
    $region45: #{tpu_custom_call.1} parent=5 // pred_check
      %p2851 = pneg %p2850
    $region46: #{tpu_custom_call.1} parent=5 // pred_check_branch
      %2853 = sbr.rel (%p2851) target = $region48
    $region47: #{tpu_custom_call.1} parent=5 // pred_region
      %s2854 = ssub.s32 %s11, 2
      // Predicated region
      $region49: #{tpu_custom_call.1} parent=47 // pred_check
        %p2855 = pneg %p175
      $region50: #{tpu_custom_call.1} parent=47 // pred_check_branch
        %2857 = sbr.rel (%p2855) target = $region52
      $region51: #{tpu_custom_call.1} parent=47 // pred_region
        %s2858 = smul.u32 8, %s23
        %p2859 = scmp.lt.s32.totalorder %s22, 1
        %s2860 = scalar_select %p2859, %s22, 1
        %p2861 = scmp.lt.s32.totalorder %s2858, 15
        %s2862 = scalar_select %p2861, %s2858, 15
        %s2863 = smul.addr %s2862, 2
        %s2864 = smul.addr %s2860, 32
        %s2865 = sadd.s32 %s2863, %s2864
        %s2866 = smul.addr %s2865, 8
        %s2867 = scalar_lea.vmem %s5, %s2866
      $region52: #{tpu_custom_call.1} parent=47 // pred_fallthru
        _
    $region48: #{tpu_custom_call.1} parent=5 // pred_fallthru
      _
  $region6: #{tpu_custom_call.1} parent=0 // loop_footer
    %s15 = sadd.s32 1, %s11
  $region7: #{tpu_custom_call.1} parent=0 // loop_footer_branch
    %10 = sbr.rel target = $region3
  $region8: #{tpu_custom_call.1} parent=0 // loop_exit
    _

</llo_original>
